<compile_context>
chip_gen: v5e
topology: v5e:2x2
jax: 0.10.0
libtpu: 0.0.40
codegen_flags: <defaults>
</compile_context>

<pallas_src>
import jax
import jax.numpy as jnp
from jax.experimental import pallas as pl
from jax.experimental.pallas import tpu as pltpu

NUM_CLASSES = 19   # BDD100K semantic segmentation classes
IN_CHANNELS = 3


def _semseg_kernel(x_ref, w_ref, b_ref, o_ref):
    """x_ref: (C, TH, 2*Wo) bf16/f32 -- horizontally pair-summed rows; lane dim
                                        holds [h-sum of row 2r | h-sum of row 2r+1]
       w_ref: (K*C,) f32  SMEM       -- head weight, 0.25 pooling scale and the
                                        tanh half-angle folded in (w * 0.125)
       b_ref: (K,)   f32  SMEM       -- head bias * 0.5
       o_ref: (K, TH, Wo) uint8      -- floor(sigmoid(logits) * 255)"""
    wo = o_ref.shape[-1]

    # Vertical pair-sum (static, lane-aligned slice) -> sum of the 2x2 block.
    sum4 = [x_ref[c, :, :wo].astype(jnp.float32)
            + x_ref[c, :, wo:].astype(jnp.float32)
            for c in range(IN_CHANNELS)]

    # 3 -> 19 projection as SMEM-scalar x vector FMAs on the VPU, one EUP tanh
    # per class:  sigmoid(x) * 255 == 127.5 * tanh(x / 2) + 127.5.
    # (On v6e/v7x this epilogue could also run in bf16 for ~2x VALU/EUP rate;
    # kept in f32 so the single code path stays correct and fast on v5e too.)
    for k in range(NUM_CLASSES):
        z = b_ref[k] + w_ref[k * IN_CHANNELS] * sum4[0]
        for c in range(1, IN_CHANNELS):
            z = z + w_ref[k * IN_CHANNELS + c] * sum4[c]
        y = jnp.clip(127.5 * jnp.tanh(z) + 127.5, 0.0, 255.0)
        o_ref[k] = y.astype(jnp.int32).astype(jnp.uint8)


def _pick_row_tile(ho, target_rows):
    """Largest divisor of `ho` that is <= target_rows and keeps blocked sublane
    dims aligned: prefer multiples of 32 (safe for f32/bf16/uint8 packing),
    then multiples of 8 (documented (8,128) block rule).  Falls back to the
    full height, which is always legal (full-dim blocks are unconstrained)."""
    target = max(int(target_rows), 8)
    for align in (32, 8):
        divs = [d for d in range(align, ho + 1, align) if ho % d == 0]
        if divs:
            under = [d for d in divs if d <= target]
            return max(under) if under else min(divs)
    return ho


def label_sem_seg(img_nchw, weight, bias, *, tile_tokens=128 * 1024,
                  compute_dtype=jnp.bfloat16):
    """img_nchw: (N, 3, H, W) float -> (N, 19, H//2, W//2) uint8.

    weight: (3, 19), bias: (19,) -- stand-in 1x1-conv segmentation head.
    compute_dtype: HBM dtype fed to the kernel (bf16 halves the input stream;
    pass jnp.float32 if bit-closeness matters more than bandwidth)."""
    N, C, H, W = img_nchw.shape
    assert C == IN_CHANNELS and H % 2 == 0 and W % 2 == 0
    Ho, Wo = H // 2, W // 2
    K = NUM_CLASSES

    # Horizontal pair-sum only (contiguous trailing-axis reduce -> cheap XLA
    # pass, no transpose), then a FREE reshape so the two source rows of each
    # output row sit side by side in the lane dim:
    #   x[n, c, r, :Wo] = h-sum of input row 2r, x[n, c, r, Wo:] = row 2r+1.
    hsum = (img_nchw.astype(jnp.float32)
            .reshape(N, C, H, Wo, 2).sum(-1)
            .astype(compute_dtype)
            .reshape(N, C, Ho, 2 * Wo))

    # Fold the 0.25 pooling scale and the tanh half-angle into the parameters:
    #   sigmoid(w.(sum4/4) + b) * 255 == 127.5*tanh((w/8).sum4 + b/2) + 127.5
    w_flat = (weight.astype(jnp.float32) * 0.125).T.reshape(-1)   # (K*C,)
    b_eff = bias.astype(jnp.float32) * 0.5                        # (K,)

    th = _pick_row_tile(Ho, max(1, tile_tokens // max(Wo, 1)))
    grid = (N, Ho // th)   # exact divisor -> no token padding anywhere

    return pl.pallas_call(
        _semseg_kernel,
        out_shape=jax.ShapeDtypeStruct((N, K, Ho, Wo), jnp.uint8),
        grid_spec=pltpu.PrefetchScalarGridSpec(
            num_scalar_prefetch=0,
            grid=grid,
            in_specs=[
                pl.BlockSpec((None, C, th, 2 * Wo), lambda n, i: (n, 0, i, 0)),
                pl.BlockSpec(memory_space=pltpu.MemorySpace.SMEM),   # weight
                pl.BlockSpec(memory_space=pltpu.MemorySpace.SMEM),   # bias
            ],
            out_specs=pl.BlockSpec((None, K, th, Wo),
                                   lambda n, i: (n, 0, i, 0)),
        ),
        compiler_params=pltpu.CompilerParams(
            # Both grid axes are independent -> megacore-shardable on v7x
            # (keep N * Ho//th >= 4 when tuning tile_tokens up at N=1).
            dimension_semantics=("parallel", "parallel"),
            vmem_limit_bytes=32 * 1024 * 1024),
    )(hsum, w_flat, b_eff)


if __name__ == "__main__":
    key = jax.random.PRNGKey(0)
    k_img, k_w, k_b, k_img2 = jax.random.split(key, 4)

    # deterministic synthetic parameters (stand-in segmentation head)
    weight = jax.random.normal(k_w, (IN_CHANNELS, NUM_CLASSES), jnp.float32) * 0.5
    bias = jax.random.normal(k_b, (NUM_CLASSES,), jnp.float32) * 0.1

    def reference(img):
        # exact 2x2 mean (== x0.5 bilinear, align_corners=False) -> 1x1 conv
        # -> sigmoid*255 -> truncate, all in f32.
        n, c, h, w = img.shape
        pooled = img.reshape(n, c, h // 2, 2, w // 2, 2).mean(axis=(3, 5))
        logits = jnp.einsum("nchw,ck->nkhw", pooled, weight) + bias[None, :, None, None]
        return jnp.floor(jax.nn.sigmoid(logits) * 255.0).astype(jnp.int32)

    # small NCHW batch, consistent with the PyTorch forward signature
    img = jax.random.normal(k_img, (2, IN_CHANNELS, 16, 16), jnp.float32)
    pred = jax.block_until_ready(label_sem_seg(img, weight, bias))
    assert pred.shape == (2, NUM_CLASSES, 8, 8)
    assert pred.dtype == jnp.uint8
    # a few LSB of slack for the bf16 input feed and the EUP tanh
    diff = int(jnp.max(jnp.abs(pred.astype(jnp.int32) - reference(img))))
    assert diff <= 4, f"max |diff| = {diff}"

    # second shape exercising a multi-row-tile grid (th < Ho, grid=(1, 2))
    img2 = jax.random.normal(k_img2, (1, IN_CHANNELS, 128, 256), jnp.float32)
    pred2 = jax.block_until_ready(
        label_sem_seg(img2, weight, bias, tile_tokens=32 * 128))
    assert pred2.shape == (1, NUM_CLASSES, 64, 128)
    assert pred2.dtype == jnp.uint8
    diff2 = int(jnp.max(jnp.abs(pred2.astype(jnp.int32) - reference(img2))))
    assert diff2 <= 4, f"max |diff| = {diff2}"

    print("KERNEL_OK")
</pallas_src>

<mosaic_0001>
module attributes {stable_mosaic.version = 11 : i64} {
  func.func @_semseg_kernel(%arg0: i32, %arg1: i32, %arg2: memref<1x3x8x16xbf16, #tpu.memory_space<vmem>>, %arg3: memref<57xf32, #tpu.memory_space<smem>>, %arg4: memref<19xf32, #tpu.memory_space<smem>>, %arg5: memref<1x19x8x8xi8, #tpu.memory_space<vmem>>) attributes {dimension_semantics = [#tpu.dimension_semantics<parallel>, #tpu.dimension_semantics<parallel>], iteration_bounds = array<i64: 2, 1>, scalar_prefetch = 0 : i64, scratch_operands = 0 : i64, tpu.core_type = #tpu.core_type<tc>, window_params = [{transform_indices = @transform_0, window_bounds = array<i64: 1, 3, 8, 16>}, {transform_indices = @transform_1, window_bounds = array<i64: 57>}, {transform_indices = @transform_2, window_bounds = array<i64: 19>}, {transform_indices = @transform_3, window_bounds = array<i64: 1, 19, 8, 8>}]} {
    %c0 = arith.constant 0 : index
    %c0_0 = arith.constant 0 : index
    %c0_1 = arith.constant 0 : index
    %c0_2 = arith.constant 0 : index
    %0 = vector.load %arg2[%c0, %c0_0, %c0_1, %c0_2] : memref<1x3x8x16xbf16, #tpu.memory_space<vmem>>, vector<1x1x8x8xbf16>
    %1 = vector.shape_cast %0 : vector<1x1x8x8xbf16> to vector<8x8xbf16>
    %2 = arith.extf %1 : vector<8x8xbf16> to vector<8x8xf32>
    %c0_3 = arith.constant 0 : index
    %c0_4 = arith.constant 0 : index
    %c0_5 = arith.constant 0 : index
    %c8 = arith.constant 8 : index
    %3 = vector.load %arg2[%c0_3, %c0_4, %c0_5, %c8] : memref<1x3x8x16xbf16, #tpu.memory_space<vmem>>, vector<1x1x8x8xbf16>
    %4 = vector.shape_cast %3 : vector<1x1x8x8xbf16> to vector<8x8xbf16>
    %5 = arith.extf %4 : vector<8x8xbf16> to vector<8x8xf32>
    %6 = arith.addf %2, %5 : vector<8x8xf32>
    %c0_6 = arith.constant 0 : index
    %c1 = arith.constant 1 : index
    %c0_7 = arith.constant 0 : index
    %c0_8 = arith.constant 0 : index
    %7 = vector.load %arg2[%c0_6, %c1, %c0_7, %c0_8] : memref<1x3x8x16xbf16, #tpu.memory_space<vmem>>, vector<1x1x8x8xbf16>
    %8 = vector.shape_cast %7 : vector<1x1x8x8xbf16> to vector<8x8xbf16>
    %9 = arith.extf %8 : vector<8x8xbf16> to vector<8x8xf32>
    %c0_9 = arith.constant 0 : index
    %c1_10 = arith.constant 1 : index
    %c0_11 = arith.constant 0 : index
    %c8_12 = arith.constant 8 : index
    %10 = vector.load %arg2[%c0_9, %c1_10, %c0_11, %c8_12] : memref<1x3x8x16xbf16, #tpu.memory_space<vmem>>, vector<1x1x8x8xbf16>
    %11 = vector.shape_cast %10 : vector<1x1x8x8xbf16> to vector<8x8xbf16>
    %12 = arith.extf %11 : vector<8x8xbf16> to vector<8x8xf32>
    %13 = arith.addf %9, %12 : vector<8x8xf32>
    %c0_13 = arith.constant 0 : index
    %c2 = arith.constant 2 : index
    %c0_14 = arith.constant 0 : index
    %c0_15 = arith.constant 0 : index
    %14 = vector.load %arg2[%c0_13, %c2, %c0_14, %c0_15] : memref<1x3x8x16xbf16, #tpu.memory_space<vmem>>, vector<1x1x8x8xbf16>
    %15 = vector.shape_cast %14 : vector<1x1x8x8xbf16> to vector<8x8xbf16>
    %16 = arith.extf %15 : vector<8x8xbf16> to vector<8x8xf32>
    %c0_16 = arith.constant 0 : index
    %c2_17 = arith.constant 2 : index
    %c0_18 = arith.constant 0 : index
    %c8_19 = arith.constant 8 : index
    %17 = vector.load %arg2[%c0_16, %c2_17, %c0_18, %c8_19] : memref<1x3x8x16xbf16, #tpu.memory_space<vmem>>, vector<1x1x8x8xbf16>
    %18 = vector.shape_cast %17 : vector<1x1x8x8xbf16> to vector<8x8xbf16>
    %19 = arith.extf %18 : vector<8x8xbf16> to vector<8x8xf32>
    %20 = arith.addf %16, %19 : vector<8x8xf32>
    %c0_20 = arith.constant 0 : index
    %21 = memref.load %arg4[%c0_20] : memref<19xf32, #tpu.memory_space<smem>>
    %c0_21 = arith.constant 0 : index
    %22 = memref.load %arg3[%c0_21] : memref<57xf32, #tpu.memory_space<smem>>
    %23 = vector.broadcast %22 : f32 to vector<8x8xf32>
    %24 = arith.mulf %23, %6 : vector<8x8xf32>
    %25 = vector.broadcast %21 : f32 to vector<8x8xf32>
    %26 = arith.addf %25, %24 : vector<8x8xf32>
    %c1_22 = arith.constant 1 : index
    %27 = memref.load %arg3[%c1_22] : memref<57xf32, #tpu.memory_space<smem>>
    %28 = vector.broadcast %27 : f32 to vector<8x8xf32>
    %29 = arith.mulf %28, %13 : vector<8x8xf32>
    %30 = arith.addf %26, %29 : vector<8x8xf32>
    %c2_23 = arith.constant 2 : index
    %31 = memref.load %arg3[%c2_23] : memref<57xf32, #tpu.memory_space<smem>>
    %32 = vector.broadcast %31 : f32 to vector<8x8xf32>
    %33 = arith.mulf %32, %20 : vector<8x8xf32>
    %34 = arith.addf %30, %33 : vector<8x8xf32>
    %35 = math.tanh %34 : vector<8x8xf32>
    %cst = arith.constant 1.275000e+02 : f32
    %36 = vector.broadcast %cst : f32 to vector<8x8xf32>
    %37 = arith.mulf %36, %35 : vector<8x8xf32>
    %cst_24 = arith.constant 1.275000e+02 : f32
    %38 = vector.broadcast %cst_24 : f32 to vector<8x8xf32>
    %39 = arith.addf %37, %38 : vector<8x8xf32>
    %cst_25 = arith.constant 0.000000e+00 : f32
    %cst_26 = arith.constant 2.550000e+02 : f32
    %40 = vector.broadcast %cst_25 : f32 to vector<8x8xf32>
    %41 = arith.maximumf %40, %39 : vector<8x8xf32>
    %42 = vector.broadcast %cst_26 : f32 to vector<8x8xf32>
    %43 = arith.minimumf %42, %41 : vector<8x8xf32>
    %44 = arith.fptosi %43 : vector<8x8xf32> to vector<8x8xi32>
    %45 = arith.trunci %44 : vector<8x8xi32> to vector<8x8xi8>
    %c0_27 = arith.constant 0 : index
    %c0_28 = arith.constant 0 : index
    %c0_29 = arith.constant 0 : index
    %c0_30 = arith.constant 0 : index
    %46 = vector.load %arg5[%c0_27, %c0_28, %c0_29, %c0_30] : memref<1x19x8x8xi8, #tpu.memory_space<vmem>>, vector<1x1x8x8xi8>
    %47 = vector.shape_cast %46 : vector<1x1x8x8xi8> to vector<8x8xi8>
    %48 = vector.shape_cast %45 : vector<8x8xi8> to vector<1x1x8x8xi8>
    tpu.vector_store %arg5[%c0_27, %c0_28, %c0_29, %c0_30], %48 {strides = array<i32>} : memref<1x19x8x8xi8, #tpu.memory_space<vmem>>, vector<1x1x8x8xi8>,
    %c1_31 = arith.constant 1 : index
    %49 = memref.load %arg4[%c1_31] : memref<19xf32, #tpu.memory_space<smem>>
    %c3 = arith.constant 3 : index
    %50 = memref.load %arg3[%c3] : memref<57xf32, #tpu.memory_space<smem>>
    %51 = vector.broadcast %50 : f32 to vector<8x8xf32>
    %52 = arith.mulf %51, %6 : vector<8x8xf32>
    %53 = vector.broadcast %49 : f32 to vector<8x8xf32>
    %54 = arith.addf %53, %52 : vector<8x8xf32>
    %c4 = arith.constant 4 : index
    %55 = memref.load %arg3[%c4] : memref<57xf32, #tpu.memory_space<smem>>
    %56 = vector.broadcast %55 : f32 to vector<8x8xf32>
    %57 = arith.mulf %56, %13 : vector<8x8xf32>
    %58 = arith.addf %54, %57 : vector<8x8xf32>
    %c5 = arith.constant 5 : index
    %59 = memref.load %arg3[%c5] : memref<57xf32, #tpu.memory_space<smem>>
    %60 = vector.broadcast %59 : f32 to vector<8x8xf32>
    %61 = arith.mulf %60, %20 : vector<8x8xf32>
    %62 = arith.addf %58, %61 : vector<8x8xf32>
    %63 = math.tanh %62 : vector<8x8xf32>
    %cst_32 = arith.constant 1.275000e+02 : f32
    %64 = vector.broadcast %cst_32 : f32 to vector<8x8xf32>
    %65 = arith.mulf %64, %63 : vector<8x8xf32>
    %cst_33 = arith.constant 1.275000e+02 : f32
    %66 = vector.broadcast %cst_33 : f32 to vector<8x8xf32>
    %67 = arith.addf %65, %66 : vector<8x8xf32>
    %cst_34 = arith.constant 0.000000e+00 : f32
    %cst_35 = arith.constant 2.550000e+02 : f32
    %68 = vector.broadcast %cst_34 : f32 to vector<8x8xf32>
    %69 = arith.maximumf %68, %67 : vector<8x8xf32>
    %70 = vector.broadcast %cst_35 : f32 to vector<8x8xf32>
    %71 = arith.minimumf %70, %69 : vector<8x8xf32>
    %72 = arith.fptosi %71 : vector<8x8xf32> to vector<8x8xi32>
    %73 = arith.trunci %72 : vector<8x8xi32> to vector<8x8xi8>
    %c0_36 = arith.constant 0 : index
    %c1_37 = arith.constant 1 : index
    %c0_38 = arith.constant 0 : index
    %c0_39 = arith.constant 0 : index
    %74 = vector.load %arg5[%c0_36, %c1_37, %c0_38, %c0_39] : memref<1x19x8x8xi8, #tpu.memory_space<vmem>>, vector<1x1x8x8xi8>
    %75 = vector.shape_cast %74 : vector<1x1x8x8xi8> to vector<8x8xi8>
    %76 = vector.shape_cast %73 : vector<8x8xi8> to vector<1x1x8x8xi8>
    tpu.vector_store %arg5[%c0_36, %c1_37, %c0_38, %c0_39], %76 {strides = array<i32>} : memref<1x19x8x8xi8, #tpu.memory_space<vmem>>, vector<1x1x8x8xi8>,
    %c2_40 = arith.constant 2 : index
    %77 = memref.load %arg4[%c2_40] : memref<19xf32, #tpu.memory_space<smem>>
    %c6 = arith.constant 6 : index
    %78 = memref.load %arg3[%c6] : memref<57xf32, #tpu.memory_space<smem>>
    %79 = vector.broadcast %78 : f32 to vector<8x8xf32>
    %80 = arith.mulf %79, %6 : vector<8x8xf32>
    %81 = vector.broadcast %77 : f32 to vector<8x8xf32>
    %82 = arith.addf %81, %80 : vector<8x8xf32>
    %c7 = arith.constant 7 : index
    %83 = memref.load %arg3[%c7] : memref<57xf32, #tpu.memory_space<smem>>
    %84 = vector.broadcast %83 : f32 to vector<8x8xf32>
    %85 = arith.mulf %84, %13 : vector<8x8xf32>
    %86 = arith.addf %82, %85 : vector<8x8xf32>
    %c8_41 = arith.constant 8 : index
    %87 = memref.load %arg3[%c8_41] : memref<57xf32, #tpu.memory_space<smem>>
    %88 = vector.broadcast %87 : f32 to vector<8x8xf32>
    %89 = arith.mulf %88, %20 : vector<8x8xf32>
    %90 = arith.addf %86, %89 : vector<8x8xf32>
    %91 = math.tanh %90 : vector<8x8xf32>
    %cst_42 = arith.constant 1.275000e+02 : f32
    %92 = vector.broadcast %cst_42 : f32 to vector<8x8xf32>
    %93 = arith.mulf %92, %91 : vector<8x8xf32>
    %cst_43 = arith.constant 1.275000e+02 : f32
    %94 = vector.broadcast %cst_43 : f32 to vector<8x8xf32>
    %95 = arith.addf %93, %94 : vector<8x8xf32>
    %cst_44 = arith.constant 0.000000e+00 : f32
    %cst_45 = arith.constant 2.550000e+02 : f32
    %96 = vector.broadcast %cst_44 : f32 to vector<8x8xf32>
    %97 = arith.maximumf %96, %95 : vector<8x8xf32>
    %98 = vector.broadcast %cst_45 : f32 to vector<8x8xf32>
    %99 = arith.minimumf %98, %97 : vector<8x8xf32>
    %100 = arith.fptosi %99 : vector<8x8xf32> to vector<8x8xi32>
    %101 = arith.trunci %100 : vector<8x8xi32> to vector<8x8xi8>
    %c0_46 = arith.constant 0 : index
    %c2_47 = arith.constant 2 : index
    %c0_48 = arith.constant 0 : index
    %c0_49 = arith.constant 0 : index
    %102 = vector.load %arg5[%c0_46, %c2_47, %c0_48, %c0_49] : memref<1x19x8x8xi8, #tpu.memory_space<vmem>>, vector<1x1x8x8xi8>
    %103 = vector.shape_cast %102 : vector<1x1x8x8xi8> to vector<8x8xi8>
    %104 = vector.shape_cast %101 : vector<8x8xi8> to vector<1x1x8x8xi8>
    tpu.vector_store %arg5[%c0_46, %c2_47, %c0_48, %c0_49], %104 {strides = array<i32>} : memref<1x19x8x8xi8, #tpu.memory_space<vmem>>, vector<1x1x8x8xi8>,
    %c3_50 = arith.constant 3 : index
    %105 = memref.load %arg4[%c3_50] : memref<19xf32, #tpu.memory_space<smem>>
    %c9 = arith.constant 9 : index
    %106 = memref.load %arg3[%c9] : memref<57xf32, #tpu.memory_space<smem>>
    %107 = vector.broadcast %106 : f32 to vector<8x8xf32>
    %108 = arith.mulf %107, %6 : vector<8x8xf32>
    %109 = vector.broadcast %105 : f32 to vector<8x8xf32>
    %110 = arith.addf %109, %108 : vector<8x8xf32>
    %c10 = arith.constant 10 : index
    %111 = memref.load %arg3[%c10] : memref<57xf32, #tpu.memory_space<smem>>
    %112 = vector.broadcast %111 : f32 to vector<8x8xf32>
    %113 = arith.mulf %112, %13 : vector<8x8xf32>
    %114 = arith.addf %110, %113 : vector<8x8xf32>
    %c11 = arith.constant 11 : index
    %115 = memref.load %arg3[%c11] : memref<57xf32, #tpu.memory_space<smem>>
    %116 = vector.broadcast %115 : f32 to vector<8x8xf32>
    %117 = arith.mulf %116, %20 : vector<8x8xf32>
    %118 = arith.addf %114, %117 : vector<8x8xf32>
    %119 = math.tanh %118 : vector<8x8xf32>
    %cst_51 = arith.constant 1.275000e+02 : f32
    %120 = vector.broadcast %cst_51 : f32 to vector<8x8xf32>
    %121 = arith.mulf %120, %119 : vector<8x8xf32>
    %cst_52 = arith.constant 1.275000e+02 : f32
    %122 = vector.broadcast %cst_52 : f32 to vector<8x8xf32>
    %123 = arith.addf %121, %122 : vector<8x8xf32>
    %cst_53 = arith.constant 0.000000e+00 : f32
    %cst_54 = arith.constant 2.550000e+02 : f32
    %124 = vector.broadcast %cst_53 : f32 to vector<8x8xf32>
    %125 = arith.maximumf %124, %123 : vector<8x8xf32>
    %126 = vector.broadcast %cst_54 : f32 to vector<8x8xf32>
    %127 = arith.minimumf %126, %125 : vector<8x8xf32>
    %128 = arith.fptosi %127 : vector<8x8xf32> to vector<8x8xi32>
    %129 = arith.trunci %128 : vector<8x8xi32> to vector<8x8xi8>
    %c0_55 = arith.constant 0 : index
    %c3_56 = arith.constant 3 : index
    %c0_57 = arith.constant 0 : index
    %c0_58 = arith.constant 0 : index
    %130 = vector.load %arg5[%c0_55, %c3_56, %c0_57, %c0_58] : memref<1x19x8x8xi8, #tpu.memory_space<vmem>>, vector<1x1x8x8xi8>
    %131 = vector.shape_cast %130 : vector<1x1x8x8xi8> to vector<8x8xi8>
    %132 = vector.shape_cast %129 : vector<8x8xi8> to vector<1x1x8x8xi8>
    tpu.vector_store %arg5[%c0_55, %c3_56, %c0_57, %c0_58], %132 {strides = array<i32>} : memref<1x19x8x8xi8, #tpu.memory_space<vmem>>, vector<1x1x8x8xi8>,
    %c4_59 = arith.constant 4 : index
    %133 = memref.load %arg4[%c4_59] : memref<19xf32, #tpu.memory_space<smem>>
    %c12 = arith.constant 12 : index
    %134 = memref.load %arg3[%c12] : memref<57xf32, #tpu.memory_space<smem>>
    %135 = vector.broadcast %134 : f32 to vector<8x8xf32>
    %136 = arith.mulf %135, %6 : vector<8x8xf32>
    %137 = vector.broadcast %133 : f32 to vector<8x8xf32>
    %138 = arith.addf %137, %136 : vector<8x8xf32>
    %c13 = arith.constant 13 : index
    %139 = memref.load %arg3[%c13] : memref<57xf32, #tpu.memory_space<smem>>
    %140 = vector.broadcast %139 : f32 to vector<8x8xf32>
    %141 = arith.mulf %140, %13 : vector<8x8xf32>
    %142 = arith.addf %138, %141 : vector<8x8xf32>
    %c14 = arith.constant 14 : index
    %143 = memref.load %arg3[%c14] : memref<57xf32, #tpu.memory_space<smem>>
    %144 = vector.broadcast %143 : f32 to vector<8x8xf32>
    %145 = arith.mulf %144, %20 : vector<8x8xf32>
    %146 = arith.addf %142, %145 : vector<8x8xf32>
    %147 = math.tanh %146 : vector<8x8xf32>
    %cst_60 = arith.constant 1.275000e+02 : f32
    %148 = vector.broadcast %cst_60 : f32 to vector<8x8xf32>
    %149 = arith.mulf %148, %147 : vector<8x8xf32>
    %cst_61 = arith.constant 1.275000e+02 : f32
    %150 = vector.broadcast %cst_61 : f32 to vector<8x8xf32>
    %151 = arith.addf %149, %150 : vector<8x8xf32>
    %cst_62 = arith.constant 0.000000e+00 : f32
    %cst_63 = arith.constant 2.550000e+02 : f32
    %152 = vector.broadcast %cst_62 : f32 to vector<8x8xf32>
    %153 = arith.maximumf %152, %151 : vector<8x8xf32>
    %154 = vector.broadcast %cst_63 : f32 to vector<8x8xf32>
    %155 = arith.minimumf %154, %153 : vector<8x8xf32>
    %156 = arith.fptosi %155 : vector<8x8xf32> to vector<8x8xi32>
    %157 = arith.trunci %156 : vector<8x8xi32> to vector<8x8xi8>
    %c0_64 = arith.constant 0 : index
    %c4_65 = arith.constant 4 : index
    %c0_66 = arith.constant 0 : index
    %c0_67 = arith.constant 0 : index
    %158 = vector.load %arg5[%c0_64, %c4_65, %c0_66, %c0_67] : memref<1x19x8x8xi8, #tpu.memory_space<vmem>>, vector<1x1x8x8xi8>
    %159 = vector.shape_cast %158 : vector<1x1x8x8xi8> to vector<8x8xi8>
    %160 = vector.shape_cast %157 : vector<8x8xi8> to vector<1x1x8x8xi8>
    tpu.vector_store %arg5[%c0_64, %c4_65, %c0_66, %c0_67], %160 {strides = array<i32>} : memref<1x19x8x8xi8, #tpu.memory_space<vmem>>, vector<1x1x8x8xi8>,
    %c5_68 = arith.constant 5 : index
    %161 = memref.load %arg4[%c5_68] : memref<19xf32, #tpu.memory_space<smem>>
    %c15 = arith.constant 15 : index
    %162 = memref.load %arg3[%c15] : memref<57xf32, #tpu.memory_space<smem>>
    %163 = vector.broadcast %162 : f32 to vector<8x8xf32>
    %164 = arith.mulf %163, %6 : vector<8x8xf32>
    %165 = vector.broadcast %161 : f32 to vector<8x8xf32>
    %166 = arith.addf %165, %164 : vector<8x8xf32>
    %c16 = arith.constant 16 : index
    %167 = memref.load %arg3[%c16] : memref<57xf32, #tpu.memory_space<smem>>
    %168 = vector.broadcast %167 : f32 to vector<8x8xf32>
    %169 = arith.mulf %168, %13 : vector<8x8xf32>
    %170 = arith.addf %166, %169 : vector<8x8xf32>
    %c17 = arith.constant 17 : index
    %171 = memref.load %arg3[%c17] : memref<57xf32, #tpu.memory_space<smem>>
    %172 = vector.broadcast %171 : f32 to vector<8x8xf32>
    %173 = arith.mulf %172, %20 : vector<8x8xf32>
    %174 = arith.addf %170, %173 : vector<8x8xf32>
    %175 = math.tanh %174 : vector<8x8xf32>
    %cst_69 = arith.constant 1.275000e+02 : f32
    %176 = vector.broadcast %cst_69 : f32 to vector<8x8xf32>
    %177 = arith.mulf %176, %175 : vector<8x8xf32>
    %cst_70 = arith.constant 1.275000e+02 : f32
    %178 = vector.broadcast %cst_70 : f32 to vector<8x8xf32>
    %179 = arith.addf %177, %178 : vector<8x8xf32>
    %cst_71 = arith.constant 0.000000e+00 : f32
    %cst_72 = arith.constant 2.550000e+02 : f32
    %180 = vector.broadcast %cst_71 : f32 to vector<8x8xf32>
    %181 = arith.maximumf %180, %179 : vector<8x8xf32>
    %182 = vector.broadcast %cst_72 : f32 to vector<8x8xf32>
    %183 = arith.minimumf %182, %181 : vector<8x8xf32>
    %184 = arith.fptosi %183 : vector<8x8xf32> to vector<8x8xi32>
    %185 = arith.trunci %184 : vector<8x8xi32> to vector<8x8xi8>
    %c0_73 = arith.constant 0 : index
    %c5_74 = arith.constant 5 : index
    %c0_75 = arith.constant 0 : index
    %c0_76 = arith.constant 0 : index
    %186 = vector.load %arg5[%c0_73, %c5_74, %c0_75, %c0_76] : memref<1x19x8x8xi8, #tpu.memory_space<vmem>>, vector<1x1x8x8xi8>
    %187 = vector.shape_cast %186 : vector<1x1x8x8xi8> to vector<8x8xi8>
    %188 = vector.shape_cast %185 : vector<8x8xi8> to vector<1x1x8x8xi8>
    tpu.vector_store %arg5[%c0_73, %c5_74, %c0_75, %c0_76], %188 {strides = array<i32>} : memref<1x19x8x8xi8, #tpu.memory_space<vmem>>, vector<1x1x8x8xi8>,
    %c6_77 = arith.constant 6 : index
    %189 = memref.load %arg4[%c6_77] : memref<19xf32, #tpu.memory_space<smem>>
    %c18 = arith.constant 18 : index
    %190 = memref.load %arg3[%c18] : memref<57xf32, #tpu.memory_space<smem>>
    %191 = vector.broadcast %190 : f32 to vector<8x8xf32>
    %192 = arith.mulf %191, %6 : vector<8x8xf32>
    %193 = vector.broadcast %189 : f32 to vector<8x8xf32>
    %194 = arith.addf %193, %192 : vector<8x8xf32>
    %c19 = arith.constant 19 : index
    %195 = memref.load %arg3[%c19] : memref<57xf32, #tpu.memory_space<smem>>
    %196 = vector.broadcast %195 : f32 to vector<8x8xf32>
    %197 = arith.mulf %196, %13 : vector<8x8xf32>
    %198 = arith.addf %194, %197 : vector<8x8xf32>
    %c20 = arith.constant 20 : index
    %199 = memref.load %arg3[%c20] : memref<57xf32, #tpu.memory_space<smem>>
    %200 = vector.broadcast %199 : f32 to vector<8x8xf32>
    %201 = arith.mulf %200, %20 : vector<8x8xf32>
    %202 = arith.addf %198, %201 : vector<8x8xf32>
    %203 = math.tanh %202 : vector<8x8xf32>
    %cst_78 = arith.constant 1.275000e+02 : f32
    %204 = vector.broadcast %cst_78 : f32 to vector<8x8xf32>
    %205 = arith.mulf %204, %203 : vector<8x8xf32>
    %cst_79 = arith.constant 1.275000e+02 : f32
    %206 = vector.broadcast %cst_79 : f32 to vector<8x8xf32>
    %207 = arith.addf %205, %206 : vector<8x8xf32>
    %cst_80 = arith.constant 0.000000e+00 : f32
    %cst_81 = arith.constant 2.550000e+02 : f32
    %208 = vector.broadcast %cst_80 : f32 to vector<8x8xf32>
    %209 = arith.maximumf %208, %207 : vector<8x8xf32>
    %210 = vector.broadcast %cst_81 : f32 to vector<8x8xf32>
    %211 = arith.minimumf %210, %209 : vector<8x8xf32>
    %212 = arith.fptosi %211 : vector<8x8xf32> to vector<8x8xi32>
    %213 = arith.trunci %212 : vector<8x8xi32> to vector<8x8xi8>
    %c0_82 = arith.constant 0 : index
    %c6_83 = arith.constant 6 : index
    %c0_84 = arith.constant 0 : index
    %c0_85 = arith.constant 0 : index
    %214 = vector.load %arg5[%c0_82, %c6_83, %c0_84, %c0_85] : memref<1x19x8x8xi8, #tpu.memory_space<vmem>>, vector<1x1x8x8xi8>
    %215 = vector.shape_cast %214 : vector<1x1x8x8xi8> to vector<8x8xi8>
    %216 = vector.shape_cast %213 : vector<8x8xi8> to vector<1x1x8x8xi8>
    tpu.vector_store %arg5[%c0_82, %c6_83, %c0_84, %c0_85], %216 {strides = array<i32>} : memref<1x19x8x8xi8, #tpu.memory_space<vmem>>, vector<1x1x8x8xi8>,
    %c7_86 = arith.constant 7 : index
    %217 = memref.load %arg4[%c7_86] : memref<19xf32, #tpu.memory_space<smem>>
    %c21 = arith.constant 21 : index
    %218 = memref.load %arg3[%c21] : memref<57xf32, #tpu.memory_space<smem>>
    %219 = vector.broadcast %218 : f32 to vector<8x8xf32>
    %220 = arith.mulf %219, %6 : vector<8x8xf32>
    %221 = vector.broadcast %217 : f32 to vector<8x8xf32>
    %222 = arith.addf %221, %220 : vector<8x8xf32>
    %c22 = arith.constant 22 : index
    %223 = memref.load %arg3[%c22] : memref<57xf32, #tpu.memory_space<smem>>
    %224 = vector.broadcast %223 : f32 to vector<8x8xf32>
    %225 = arith.mulf %224, %13 : vector<8x8xf32>
    %226 = arith.addf %222, %225 : vector<8x8xf32>
    %c23 = arith.constant 23 : index
    %227 = memref.load %arg3[%c23] : memref<57xf32, #tpu.memory_space<smem>>
    %228 = vector.broadcast %227 : f32 to vector<8x8xf32>
    %229 = arith.mulf %228, %20 : vector<8x8xf32>
    %230 = arith.addf %226, %229 : vector<8x8xf32>
    %231 = math.tanh %230 : vector<8x8xf32>
    %cst_87 = arith.constant 1.275000e+02 : f32
    %232 = vector.broadcast %cst_87 : f32 to vector<8x8xf32>
    %233 = arith.mulf %232, %231 : vector<8x8xf32>
    %cst_88 = arith.constant 1.275000e+02 : f32
    %234 = vector.broadcast %cst_88 : f32 to vector<8x8xf32>
    %235 = arith.addf %233, %234 : vector<8x8xf32>
    %cst_89 = arith.constant 0.000000e+00 : f32
    %cst_90 = arith.constant 2.550000e+02 : f32
    %236 = vector.broadcast %cst_89 : f32 to vector<8x8xf32>
    %237 = arith.maximumf %236, %235 : vector<8x8xf32>
    %238 = vector.broadcast %cst_90 : f32 to vector<8x8xf32>
    %239 = arith.minimumf %238, %237 : vector<8x8xf32>
    %240 = arith.fptosi %239 : vector<8x8xf32> to vector<8x8xi32>
    %241 = arith.trunci %240 : vector<8x8xi32> to vector<8x8xi8>
    %c0_91 = arith.constant 0 : index
    %c7_92 = arith.constant 7 : index
    %c0_93 = arith.constant 0 : index
    %c0_94 = arith.constant 0 : index
    %242 = vector.load %arg5[%c0_91, %c7_92, %c0_93, %c0_94] : memref<1x19x8x8xi8, #tpu.memory_space<vmem>>, vector<1x1x8x8xi8>
    %243 = vector.shape_cast %242 : vector<1x1x8x8xi8> to vector<8x8xi8>
    %244 = vector.shape_cast %241 : vector<8x8xi8> to vector<1x1x8x8xi8>
    tpu.vector_store %arg5[%c0_91, %c7_92, %c0_93, %c0_94], %244 {strides = array<i32>} : memref<1x19x8x8xi8, #tpu.memory_space<vmem>>, vector<1x1x8x8xi8>,
    %c8_95 = arith.constant 8 : index
    %245 = memref.load %arg4[%c8_95] : memref<19xf32, #tpu.memory_space<smem>>
    %c24 = arith.constant 24 : index
    %246 = memref.load %arg3[%c24] : memref<57xf32, #tpu.memory_space<smem>>
    %247 = vector.broadcast %246 : f32 to vector<8x8xf32>
    %248 = arith.mulf %247, %6 : vector<8x8xf32>
    %249 = vector.broadcast %245 : f32 to vector<8x8xf32>
    %250 = arith.addf %249, %248 : vector<8x8xf32>
    %c25 = arith.constant 25 : index
    %251 = memref.load %arg3[%c25] : memref<57xf32, #tpu.memory_space<smem>>
    %252 = vector.broadcast %251 : f32 to vector<8x8xf32>
    %253 = arith.mulf %252, %13 : vector<8x8xf32>
    %254 = arith.addf %250, %253 : vector<8x8xf32>
    %c26 = arith.constant 26 : index
    %255 = memref.load %arg3[%c26] : memref<57xf32, #tpu.memory_space<smem>>
    %256 = vector.broadcast %255 : f32 to vector<8x8xf32>
    %257 = arith.mulf %256, %20 : vector<8x8xf32>
    %258 = arith.addf %254, %257 : vector<8x8xf32>
    %259 = math.tanh %258 : vector<8x8xf32>
    %cst_96 = arith.constant 1.275000e+02 : f32
    %260 = vector.broadcast %cst_96 : f32 to vector<8x8xf32>
    %261 = arith.mulf %260, %259 : vector<8x8xf32>
    %cst_97 = arith.constant 1.275000e+02 : f32
    %262 = vector.broadcast %cst_97 : f32 to vector<8x8xf32>
    %263 = arith.addf %261, %262 : vector<8x8xf32>
    %cst_98 = arith.constant 0.000000e+00 : f32
    %cst_99 = arith.constant 2.550000e+02 : f32
    %264 = vector.broadcast %cst_98 : f32 to vector<8x8xf32>
    %265 = arith.maximumf %264, %263 : vector<8x8xf32>
    %266 = vector.broadcast %cst_99 : f32 to vector<8x8xf32>
    %267 = arith.minimumf %266, %265 : vector<8x8xf32>
    %268 = arith.fptosi %267 : vector<8x8xf32> to vector<8x8xi32>
    %269 = arith.trunci %268 : vector<8x8xi32> to vector<8x8xi8>
    %c0_100 = arith.constant 0 : index
    %c8_101 = arith.constant 8 : index
    %c0_102 = arith.constant 0 : index
    %c0_103 = arith.constant 0 : index
    %270 = vector.load %arg5[%c0_100, %c8_101, %c0_102, %c0_103] : memref<1x19x8x8xi8, #tpu.memory_space<vmem>>, vector<1x1x8x8xi8>
    %271 = vector.shape_cast %270 : vector<1x1x8x8xi8> to vector<8x8xi8>
    %272 = vector.shape_cast %269 : vector<8x8xi8> to vector<1x1x8x8xi8>
    tpu.vector_store %arg5[%c0_100, %c8_101, %c0_102, %c0_103], %272 {strides = array<i32>} : memref<1x19x8x8xi8, #tpu.memory_space<vmem>>, vector<1x1x8x8xi8>,
    %c9_104 = arith.constant 9 : index
    %273 = memref.load %arg4[%c9_104] : memref<19xf32, #tpu.memory_space<smem>>
    %c27 = arith.constant 27 : index
    %274 = memref.load %arg3[%c27] : memref<57xf32, #tpu.memory_space<smem>>
    %275 = vector.broadcast %274 : f32 to vector<8x8xf32>
    %276 = arith.mulf %275, %6 : vector<8x8xf32>
    %277 = vector.broadcast %273 : f32 to vector<8x8xf32>
    %278 = arith.addf %277, %276 : vector<8x8xf32>
    %c28 = arith.constant 28 : index
    %279 = memref.load %arg3[%c28] : memref<57xf32, #tpu.memory_space<smem>>
    %280 = vector.broadcast %279 : f32 to vector<8x8xf32>
    %281 = arith.mulf %280, %13 : vector<8x8xf32>
    %282 = arith.addf %278, %281 : vector<8x8xf32>
    %c29 = arith.constant 29 : index
    %283 = memref.load %arg3[%c29] : memref<57xf32, #tpu.memory_space<smem>>
    %284 = vector.broadcast %283 : f32 to vector<8x8xf32>
    %285 = arith.mulf %284, %20 : vector<8x8xf32>
    %286 = arith.addf %282, %285 : vector<8x8xf32>
    %287 = math.tanh %286 : vector<8x8xf32>
    %cst_105 = arith.constant 1.275000e+02 : f32
    %288 = vector.broadcast %cst_105 : f32 to vector<8x8xf32>
    %289 = arith.mulf %288, %287 : vector<8x8xf32>
    %cst_106 = arith.constant 1.275000e+02 : f32
    %290 = vector.broadcast %cst_106 : f32 to vector<8x8xf32>
    %291 = arith.addf %289, %290 : vector<8x8xf32>
    %cst_107 = arith.constant 0.000000e+00 : f32
    %cst_108 = arith.constant 2.550000e+02 : f32
    %292 = vector.broadcast %cst_107 : f32 to vector<8x8xf32>
    %293 = arith.maximumf %292, %291 : vector<8x8xf32>
    %294 = vector.broadcast %cst_108 : f32 to vector<8x8xf32>
    %295 = arith.minimumf %294, %293 : vector<8x8xf32>
    %296 = arith.fptosi %295 : vector<8x8xf32> to vector<8x8xi32>
    %297 = arith.trunci %296 : vector<8x8xi32> to vector<8x8xi8>
    %c0_109 = arith.constant 0 : index
    %c9_110 = arith.constant 9 : index
    %c0_111 = arith.constant 0 : index
    %c0_112 = arith.constant 0 : index
    %298 = vector.load %arg5[%c0_109, %c9_110, %c0_111, %c0_112] : memref<1x19x8x8xi8, #tpu.memory_space<vmem>>, vector<1x1x8x8xi8>
    %299 = vector.shape_cast %298 : vector<1x1x8x8xi8> to vector<8x8xi8>
    %300 = vector.shape_cast %297 : vector<8x8xi8> to vector<1x1x8x8xi8>
    tpu.vector_store %arg5[%c0_109, %c9_110, %c0_111, %c0_112], %300 {strides = array<i32>} : memref<1x19x8x8xi8, #tpu.memory_space<vmem>>, vector<1x1x8x8xi8>,
    %c10_113 = arith.constant 10 : index
    %301 = memref.load %arg4[%c10_113] : memref<19xf32, #tpu.memory_space<smem>>
    %c30 = arith.constant 30 : index
    %302 = memref.load %arg3[%c30] : memref<57xf32, #tpu.memory_space<smem>>
    %303 = vector.broadcast %302 : f32 to vector<8x8xf32>
    %304 = arith.mulf %303, %6 : vector<8x8xf32>
    %305 = vector.broadcast %301 : f32 to vector<8x8xf32>
    %306 = arith.addf %305, %304 : vector<8x8xf32>
    %c31 = arith.constant 31 : index
    %307 = memref.load %arg3[%c31] : memref<57xf32, #tpu.memory_space<smem>>
    %308 = vector.broadcast %307 : f32 to vector<8x8xf32>
    %309 = arith.mulf %308, %13 : vector<8x8xf32>
    %310 = arith.addf %306, %309 : vector<8x8xf32>
    %c32 = arith.constant 32 : index
    %311 = memref.load %arg3[%c32] : memref<57xf32, #tpu.memory_space<smem>>
    %312 = vector.broadcast %311 : f32 to vector<8x8xf32>
    %313 = arith.mulf %312, %20 : vector<8x8xf32>
    %314 = arith.addf %310, %313 : vector<8x8xf32>
    %315 = math.tanh %314 : vector<8x8xf32>
    %cst_114 = arith.constant 1.275000e+02 : f32
    %316 = vector.broadcast %cst_114 : f32 to vector<8x8xf32>
    %317 = arith.mulf %316, %315 : vector<8x8xf32>
    %cst_115 = arith.constant 1.275000e+02 : f32
    %318 = vector.broadcast %cst_115 : f32 to vector<8x8xf32>
    %319 = arith.addf %317, %318 : vector<8x8xf32>
    %cst_116 = arith.constant 0.000000e+00 : f32
    %cst_117 = arith.constant 2.550000e+02 : f32
    %320 = vector.broadcast %cst_116 : f32 to vector<8x8xf32>
    %321 = arith.maximumf %320, %319 : vector<8x8xf32>
    %322 = vector.broadcast %cst_117 : f32 to vector<8x8xf32>
    %323 = arith.minimumf %322, %321 : vector<8x8xf32>
    %324 = arith.fptosi %323 : vector<8x8xf32> to vector<8x8xi32>
    %325 = arith.trunci %324 : vector<8x8xi32> to vector<8x8xi8>
    %c0_118 = arith.constant 0 : index
    %c10_119 = arith.constant 10 : index
    %c0_120 = arith.constant 0 : index
    %c0_121 = arith.constant 0 : index
    %326 = vector.load %arg5[%c0_118, %c10_119, %c0_120, %c0_121] : memref<1x19x8x8xi8, #tpu.memory_space<vmem>>, vector<1x1x8x8xi8>
    %327 = vector.shape_cast %326 : vector<1x1x8x8xi8> to vector<8x8xi8>
    %328 = vector.shape_cast %325 : vector<8x8xi8> to vector<1x1x8x8xi8>
    tpu.vector_store %arg5[%c0_118, %c10_119, %c0_120, %c0_121], %328 {strides = array<i32>} : memref<1x19x8x8xi8, #tpu.memory_space<vmem>>, vector<1x1x8x8xi8>,
    %c11_122 = arith.constant 11 : index
    %329 = memref.load %arg4[%c11_122] : memref<19xf32, #tpu.memory_space<smem>>
    %c33 = arith.constant 33 : index
    %330 = memref.load %arg3[%c33] : memref<57xf32, #tpu.memory_space<smem>>
    %331 = vector.broadcast %330 : f32 to vector<8x8xf32>
    %332 = arith.mulf %331, %6 : vector<8x8xf32>
    %333 = vector.broadcast %329 : f32 to vector<8x8xf32>
    %334 = arith.addf %333, %332 : vector<8x8xf32>
    %c34 = arith.constant 34 : index
    %335 = memref.load %arg3[%c34] : memref<57xf32, #tpu.memory_space<smem>>
    %336 = vector.broadcast %335 : f32 to vector<8x8xf32>
    %337 = arith.mulf %336, %13 : vector<8x8xf32>
    %338 = arith.addf %334, %337 : vector<8x8xf32>
    %c35 = arith.constant 35 : index
    %339 = memref.load %arg3[%c35] : memref<57xf32, #tpu.memory_space<smem>>
    %340 = vector.broadcast %339 : f32 to vector<8x8xf32>
    %341 = arith.mulf %340, %20 : vector<8x8xf32>
    %342 = arith.addf %338, %341 : vector<8x8xf32>
    %343 = math.tanh %342 : vector<8x8xf32>
    %cst_123 = arith.constant 1.275000e+02 : f32
    %344 = vector.broadcast %cst_123 : f32 to vector<8x8xf32>
    %345 = arith.mulf %344, %343 : vector<8x8xf32>
    %cst_124 = arith.constant 1.275000e+02 : f32
    %346 = vector.broadcast %cst_124 : f32 to vector<8x8xf32>
    %347 = arith.addf %345, %346 : vector<8x8xf32>
    %cst_125 = arith.constant 0.000000e+00 : f32
    %cst_126 = arith.constant 2.550000e+02 : f32
    %348 = vector.broadcast %cst_125 : f32 to vector<8x8xf32>
    %349 = arith.maximumf %348, %347 : vector<8x8xf32>
    %350 = vector.broadcast %cst_126 : f32 to vector<8x8xf32>
    %351 = arith.minimumf %350, %349 : vector<8x8xf32>
    %352 = arith.fptosi %351 : vector<8x8xf32> to vector<8x8xi32>
    %353 = arith.trunci %352 : vector<8x8xi32> to vector<8x8xi8>
    %c0_127 = arith.constant 0 : index
    %c11_128 = arith.constant 11 : index
    %c0_129 = arith.constant 0 : index
    %c0_130 = arith.constant 0 : index
    %354 = vector.load %arg5[%c0_127, %c11_128, %c0_129, %c0_130] : memref<1x19x8x8xi8, #tpu.memory_space<vmem>>, vector<1x1x8x8xi8>
    %355 = vector.shape_cast %354 : vector<1x1x8x8xi8> to vector<8x8xi8>
    %356 = vector.shape_cast %353 : vector<8x8xi8> to vector<1x1x8x8xi8>
    tpu.vector_store %arg5[%c0_127, %c11_128, %c0_129, %c0_130], %356 {strides = array<i32>} : memref<1x19x8x8xi8, #tpu.memory_space<vmem>>, vector<1x1x8x8xi8>,
    %c12_131 = arith.constant 12 : index
    %357 = memref.load %arg4[%c12_131] : memref<19xf32, #tpu.memory_space<smem>>
    %c36 = arith.constant 36 : index
    %358 = memref.load %arg3[%c36] : memref<57xf32, #tpu.memory_space<smem>>
    %359 = vector.broadcast %358 : f32 to vector<8x8xf32>
    %360 = arith.mulf %359, %6 : vector<8x8xf32>
    %361 = vector.broadcast %357 : f32 to vector<8x8xf32>
    %362 = arith.addf %361, %360 : vector<8x8xf32>
    %c37 = arith.constant 37 : index
    %363 = memref.load %arg3[%c37] : memref<57xf32, #tpu.memory_space<smem>>
    %364 = vector.broadcast %363 : f32 to vector<8x8xf32>
    %365 = arith.mulf %364, %13 : vector<8x8xf32>
    %366 = arith.addf %362, %365 : vector<8x8xf32>
    %c38 = arith.constant 38 : index
    %367 = memref.load %arg3[%c38] : memref<57xf32, #tpu.memory_space<smem>>
    %368 = vector.broadcast %367 : f32 to vector<8x8xf32>
    %369 = arith.mulf %368, %20 : vector<8x8xf32>
    %370 = arith.addf %366, %369 : vector<8x8xf32>
    %371 = math.tanh %370 : vector<8x8xf32>
    %cst_132 = arith.constant 1.275000e+02 : f32
    %372 = vector.broadcast %cst_132 : f32 to vector<8x8xf32>
    %373 = arith.mulf %372, %371 : vector<8x8xf32>
    %cst_133 = arith.constant 1.275000e+02 : f32
    %374 = vector.broadcast %cst_133 : f32 to vector<8x8xf32>
    %375 = arith.addf %373, %374 : vector<8x8xf32>
    %cst_134 = arith.constant 0.000000e+00 : f32
    %cst_135 = arith.constant 2.550000e+02 : f32
    %376 = vector.broadcast %cst_134 : f32 to vector<8x8xf32>
    %377 = arith.maximumf %376, %375 : vector<8x8xf32>
    %378 = vector.broadcast %cst_135 : f32 to vector<8x8xf32>
    %379 = arith.minimumf %378, %377 : vector<8x8xf32>
    %380 = arith.fptosi %379 : vector<8x8xf32> to vector<8x8xi32>
    %381 = arith.trunci %380 : vector<8x8xi32> to vector<8x8xi8>
    %c0_136 = arith.constant 0 : index
    %c12_137 = arith.constant 12 : index
    %c0_138 = arith.constant 0 : index
    %c0_139 = arith.constant 0 : index
    %382 = vector.load %arg5[%c0_136, %c12_137, %c0_138, %c0_139] : memref<1x19x8x8xi8, #tpu.memory_space<vmem>>, vector<1x1x8x8xi8>
    %383 = vector.shape_cast %382 : vector<1x1x8x8xi8> to vector<8x8xi8>
    %384 = vector.shape_cast %381 : vector<8x8xi8> to vector<1x1x8x8xi8>
    tpu.vector_store %arg5[%c0_136, %c12_137, %c0_138, %c0_139], %384 {strides = array<i32>} : memref<1x19x8x8xi8, #tpu.memory_space<vmem>>, vector<1x1x8x8xi8>,
    %c13_140 = arith.constant 13 : index
    %385 = memref.load %arg4[%c13_140] : memref<19xf32, #tpu.memory_space<smem>>
    %c39 = arith.constant 39 : index
    %386 = memref.load %arg3[%c39] : memref<57xf32, #tpu.memory_space<smem>>
    %387 = vector.broadcast %386 : f32 to vector<8x8xf32>
    %388 = arith.mulf %387, %6 : vector<8x8xf32>
    %389 = vector.broadcast %385 : f32 to vector<8x8xf32>
    %390 = arith.addf %389, %388 : vector<8x8xf32>
    %c40 = arith.constant 40 : index
    %391 = memref.load %arg3[%c40] : memref<57xf32, #tpu.memory_space<smem>>
    %392 = vector.broadcast %391 : f32 to vector<8x8xf32>
    %393 = arith.mulf %392, %13 : vector<8x8xf32>
    %394 = arith.addf %390, %393 : vector<8x8xf32>
    %c41 = arith.constant 41 : index
    %395 = memref.load %arg3[%c41] : memref<57xf32, #tpu.memory_space<smem>>
    %396 = vector.broadcast %395 : f32 to vector<8x8xf32>
    %397 = arith.mulf %396, %20 : vector<8x8xf32>
    %398 = arith.addf %394, %397 : vector<8x8xf32>
    %399 = math.tanh %398 : vector<8x8xf32>
    %cst_141 = arith.constant 1.275000e+02 : f32
    %400 = vector.broadcast %cst_141 : f32 to vector<8x8xf32>
    %401 = arith.mulf %400, %399 : vector<8x8xf32>
    %cst_142 = arith.constant 1.275000e+02 : f32
    %402 = vector.broadcast %cst_142 : f32 to vector<8x8xf32>
    %403 = arith.addf %401, %402 : vector<8x8xf32>
    %cst_143 = arith.constant 0.000000e+00 : f32
    %cst_144 = arith.constant 2.550000e+02 : f32
    %404 = vector.broadcast %cst_143 : f32 to vector<8x8xf32>
    %405 = arith.maximumf %404, %403 : vector<8x8xf32>
    %406 = vector.broadcast %cst_144 : f32 to vector<8x8xf32>
    %407 = arith.minimumf %406, %405 : vector<8x8xf32>
    %408 = arith.fptosi %407 : vector<8x8xf32> to vector<8x8xi32>
    %409 = arith.trunci %408 : vector<8x8xi32> to vector<8x8xi8>
    %c0_145 = arith.constant 0 : index
    %c13_146 = arith.constant 13 : index
    %c0_147 = arith.constant 0 : index
    %c0_148 = arith.constant 0 : index
    %410 = vector.load %arg5[%c0_145, %c13_146, %c0_147, %c0_148] : memref<1x19x8x8xi8, #tpu.memory_space<vmem>>, vector<1x1x8x8xi8>
    %411 = vector.shape_cast %410 : vector<1x1x8x8xi8> to vector<8x8xi8>
    %412 = vector.shape_cast %409 : vector<8x8xi8> to vector<1x1x8x8xi8>
    tpu.vector_store %arg5[%c0_145, %c13_146, %c0_147, %c0_148], %412 {strides = array<i32>} : memref<1x19x8x8xi8, #tpu.memory_space<vmem>>, vector<1x1x8x8xi8>,
    %c14_149 = arith.constant 14 : index
    %413 = memref.load %arg4[%c14_149] : memref<19xf32, #tpu.memory_space<smem>>
    %c42 = arith.constant 42 : index
    %414 = memref.load %arg3[%c42] : memref<57xf32, #tpu.memory_space<smem>>
    %415 = vector.broadcast %414 : f32 to vector<8x8xf32>
    %416 = arith.mulf %415, %6 : vector<8x8xf32>
    %417 = vector.broadcast %413 : f32 to vector<8x8xf32>
    %418 = arith.addf %417, %416 : vector<8x8xf32>
    %c43 = arith.constant 43 : index
    %419 = memref.load %arg3[%c43] : memref<57xf32, #tpu.memory_space<smem>>
    %420 = vector.broadcast %419 : f32 to vector<8x8xf32>
    %421 = arith.mulf %420, %13 : vector<8x8xf32>
    %422 = arith.addf %418, %421 : vector<8x8xf32>
    %c44 = arith.constant 44 : index
    %423 = memref.load %arg3[%c44] : memref<57xf32, #tpu.memory_space<smem>>
    %424 = vector.broadcast %423 : f32 to vector<8x8xf32>
    %425 = arith.mulf %424, %20 : vector<8x8xf32>
    %426 = arith.addf %422, %425 : vector<8x8xf32>
    %427 = math.tanh %426 : vector<8x8xf32>
    %cst_150 = arith.constant 1.275000e+02 : f32
    %428 = vector.broadcast %cst_150 : f32 to vector<8x8xf32>
    %429 = arith.mulf %428, %427 : vector<8x8xf32>
    %cst_151 = arith.constant 1.275000e+02 : f32
    %430 = vector.broadcast %cst_151 : f32 to vector<8x8xf32>
    %431 = arith.addf %429, %430 : vector<8x8xf32>
    %cst_152 = arith.constant 0.000000e+00 : f32
    %cst_153 = arith.constant 2.550000e+02 : f32
    %432 = vector.broadcast %cst_152 : f32 to vector<8x8xf32>
    %433 = arith.maximumf %432, %431 : vector<8x8xf32>
    %434 = vector.broadcast %cst_153 : f32 to vector<8x8xf32>
    %435 = arith.minimumf %434, %433 : vector<8x8xf32>
    %436 = arith.fptosi %435 : vector<8x8xf32> to vector<8x8xi32>
    %437 = arith.trunci %436 : vector<8x8xi32> to vector<8x8xi8>
    %c0_154 = arith.constant 0 : index
    %c14_155 = arith.constant 14 : index
    %c0_156 = arith.constant 0 : index
    %c0_157 = arith.constant 0 : index
    %438 = vector.load %arg5[%c0_154, %c14_155, %c0_156, %c0_157] : memref<1x19x8x8xi8, #tpu.memory_space<vmem>>, vector<1x1x8x8xi8>
    %439 = vector.shape_cast %438 : vector<1x1x8x8xi8> to vector<8x8xi8>
    %440 = vector.shape_cast %437 : vector<8x8xi8> to vector<1x1x8x8xi8>
    tpu.vector_store %arg5[%c0_154, %c14_155, %c0_156, %c0_157], %440 {strides = array<i32>} : memref<1x19x8x8xi8, #tpu.memory_space<vmem>>, vector<1x1x8x8xi8>,
    %c15_158 = arith.constant 15 : index
    %441 = memref.load %arg4[%c15_158] : memref<19xf32, #tpu.memory_space<smem>>
    %c45 = arith.constant 45 : index
    %442 = memref.load %arg3[%c45] : memref<57xf32, #tpu.memory_space<smem>>
    %443 = vector.broadcast %442 : f32 to vector<8x8xf32>
    %444 = arith.mulf %443, %6 : vector<8x8xf32>
    %445 = vector.broadcast %441 : f32 to vector<8x8xf32>
    %446 = arith.addf %445, %444 : vector<8x8xf32>
    %c46 = arith.constant 46 : index
    %447 = memref.load %arg3[%c46] : memref<57xf32, #tpu.memory_space<smem>>
    %448 = vector.broadcast %447 : f32 to vector<8x8xf32>
    %449 = arith.mulf %448, %13 : vector<8x8xf32>
    %450 = arith.addf %446, %449 : vector<8x8xf32>
    %c47 = arith.constant 47 : index
    %451 = memref.load %arg3[%c47] : memref<57xf32, #tpu.memory_space<smem>>
    %452 = vector.broadcast %451 : f32 to vector<8x8xf32>
    %453 = arith.mulf %452, %20 : vector<8x8xf32>
    %454 = arith.addf %450, %453 : vector<8x8xf32>
    %455 = math.tanh %454 : vector<8x8xf32>
    %cst_159 = arith.constant 1.275000e+02 : f32
    %456 = vector.broadcast %cst_159 : f32 to vector<8x8xf32>
    %457 = arith.mulf %456, %455 : vector<8x8xf32>
    %cst_160 = arith.constant 1.275000e+02 : f32
    %458 = vector.broadcast %cst_160 : f32 to vector<8x8xf32>
    %459 = arith.addf %457, %458 : vector<8x8xf32>
    %cst_161 = arith.constant 0.000000e+00 : f32
    %cst_162 = arith.constant 2.550000e+02 : f32
    %460 = vector.broadcast %cst_161 : f32 to vector<8x8xf32>
    %461 = arith.maximumf %460, %459 : vector<8x8xf32>
    %462 = vector.broadcast %cst_162 : f32 to vector<8x8xf32>
    %463 = arith.minimumf %462, %461 : vector<8x8xf32>
    %464 = arith.fptosi %463 : vector<8x8xf32> to vector<8x8xi32>
    %465 = arith.trunci %464 : vector<8x8xi32> to vector<8x8xi8>
    %c0_163 = arith.constant 0 : index
    %c15_164 = arith.constant 15 : index
    %c0_165 = arith.constant 0 : index
    %c0_166 = arith.constant 0 : index
    %466 = vector.load %arg5[%c0_163, %c15_164, %c0_165, %c0_166] : memref<1x19x8x8xi8, #tpu.memory_space<vmem>>, vector<1x1x8x8xi8>
    %467 = vector.shape_cast %466 : vector<1x1x8x8xi8> to vector<8x8xi8>
    %468 = vector.shape_cast %465 : vector<8x8xi8> to vector<1x1x8x8xi8>
    tpu.vector_store %arg5[%c0_163, %c15_164, %c0_165, %c0_166], %468 {strides = array<i32>} : memref<1x19x8x8xi8, #tpu.memory_space<vmem>>, vector<1x1x8x8xi8>,
    %c16_167 = arith.constant 16 : index
    %469 = memref.load %arg4[%c16_167] : memref<19xf32, #tpu.memory_space<smem>>
    %c48 = arith.constant 48 : index
    %470 = memref.load %arg3[%c48] : memref<57xf32, #tpu.memory_space<smem>>
    %471 = vector.broadcast %470 : f32 to vector<8x8xf32>
    %472 = arith.mulf %471, %6 : vector<8x8xf32>
    %473 = vector.broadcast %469 : f32 to vector<8x8xf32>
    %474 = arith.addf %473, %472 : vector<8x8xf32>
    %c49 = arith.constant 49 : index
    %475 = memref.load %arg3[%c49] : memref<57xf32, #tpu.memory_space<smem>>
    %476 = vector.broadcast %475 : f32 to vector<8x8xf32>
    %477 = arith.mulf %476, %13 : vector<8x8xf32>
    %478 = arith.addf %474, %477 : vector<8x8xf32>
    %c50 = arith.constant 50 : index
    %479 = memref.load %arg3[%c50] : memref<57xf32, #tpu.memory_space<smem>>
    %480 = vector.broadcast %479 : f32 to vector<8x8xf32>
    %481 = arith.mulf %480, %20 : vector<8x8xf32>
    %482 = arith.addf %478, %481 : vector<8x8xf32>
    %483 = math.tanh %482 : vector<8x8xf32>
    %cst_168 = arith.constant 1.275000e+02 : f32
    %484 = vector.broadcast %cst_168 : f32 to vector<8x8xf32>
    %485 = arith.mulf %484, %483 : vector<8x8xf32>
    %cst_169 = arith.constant 1.275000e+02 : f32
    %486 = vector.broadcast %cst_169 : f32 to vector<8x8xf32>
    %487 = arith.addf %485, %486 : vector<8x8xf32>
    %cst_170 = arith.constant 0.000000e+00 : f32
    %cst_171 = arith.constant 2.550000e+02 : f32
    %488 = vector.broadcast %cst_170 : f32 to vector<8x8xf32>
    %489 = arith.maximumf %488, %487 : vector<8x8xf32>
    %490 = vector.broadcast %cst_171 : f32 to vector<8x8xf32>
    %491 = arith.minimumf %490, %489 : vector<8x8xf32>
    %492 = arith.fptosi %491 : vector<8x8xf32> to vector<8x8xi32>
    %493 = arith.trunci %492 : vector<8x8xi32> to vector<8x8xi8>
    %c0_172 = arith.constant 0 : index
    %c16_173 = arith.constant 16 : index
    %c0_174 = arith.constant 0 : index
    %c0_175 = arith.constant 0 : index
    %494 = vector.load %arg5[%c0_172, %c16_173, %c0_174, %c0_175] : memref<1x19x8x8xi8, #tpu.memory_space<vmem>>, vector<1x1x8x8xi8>
    %495 = vector.shape_cast %494 : vector<1x1x8x8xi8> to vector<8x8xi8>
    %496 = vector.shape_cast %493 : vector<8x8xi8> to vector<1x1x8x8xi8>
    tpu.vector_store %arg5[%c0_172, %c16_173, %c0_174, %c0_175], %496 {strides = array<i32>} : memref<1x19x8x8xi8, #tpu.memory_space<vmem>>, vector<1x1x8x8xi8>,
    %c17_176 = arith.constant 17 : index
    %497 = memref.load %arg4[%c17_176] : memref<19xf32, #tpu.memory_space<smem>>
    %c51 = arith.constant 51 : index
    %498 = memref.load %arg3[%c51] : memref<57xf32, #tpu.memory_space<smem>>
    %499 = vector.broadcast %498 : f32 to vector<8x8xf32>
    %500 = arith.mulf %499, %6 : vector<8x8xf32>
    %501 = vector.broadcast %497 : f32 to vector<8x8xf32>
    %502 = arith.addf %501, %500 : vector<8x8xf32>
    %c52 = arith.constant 52 : index
    %503 = memref.load %arg3[%c52] : memref<57xf32, #tpu.memory_space<smem>>
    %504 = vector.broadcast %503 : f32 to vector<8x8xf32>
    %505 = arith.mulf %504, %13 : vector<8x8xf32>
    %506 = arith.addf %502, %505 : vector<8x8xf32>
    %c53 = arith.constant 53 : index
    %507 = memref.load %arg3[%c53] : memref<57xf32, #tpu.memory_space<smem>>
    %508 = vector.broadcast %507 : f32 to vector<8x8xf32>
    %509 = arith.mulf %508, %20 : vector<8x8xf32>
    %510 = arith.addf %506, %509 : vector<8x8xf32>
    %511 = math.tanh %510 : vector<8x8xf32>
    %cst_177 = arith.constant 1.275000e+02 : f32
    %512 = vector.broadcast %cst_177 : f32 to vector<8x8xf32>
    %513 = arith.mulf %512, %511 : vector<8x8xf32>
    %cst_178 = arith.constant 1.275000e+02 : f32
    %514 = vector.broadcast %cst_178 : f32 to vector<8x8xf32>
    %515 = arith.addf %513, %514 : vector<8x8xf32>
    %cst_179 = arith.constant 0.000000e+00 : f32
    %cst_180 = arith.constant 2.550000e+02 : f32
    %516 = vector.broadcast %cst_179 : f32 to vector<8x8xf32>
    %517 = arith.maximumf %516, %515 : vector<8x8xf32>
    %518 = vector.broadcast %cst_180 : f32 to vector<8x8xf32>
    %519 = arith.minimumf %518, %517 : vector<8x8xf32>
    %520 = arith.fptosi %519 : vector<8x8xf32> to vector<8x8xi32>
    %521 = arith.trunci %520 : vector<8x8xi32> to vector<8x8xi8>
    %c0_181 = arith.constant 0 : index
    %c17_182 = arith.constant 17 : index
    %c0_183 = arith.constant 0 : index
    %c0_184 = arith.constant 0 : index
    %522 = vector.load %arg5[%c0_181, %c17_182, %c0_183, %c0_184] : memref<1x19x8x8xi8, #tpu.memory_space<vmem>>, vector<1x1x8x8xi8>
    %523 = vector.shape_cast %522 : vector<1x1x8x8xi8> to vector<8x8xi8>
    %524 = vector.shape_cast %521 : vector<8x8xi8> to vector<1x1x8x8xi8>
    tpu.vector_store %arg5[%c0_181, %c17_182, %c0_183, %c0_184], %524 {strides = array<i32>} : memref<1x19x8x8xi8, #tpu.memory_space<vmem>>, vector<1x1x8x8xi8>,
    %c18_185 = arith.constant 18 : index
    %525 = memref.load %arg4[%c18_185] : memref<19xf32, #tpu.memory_space<smem>>
    %c54 = arith.constant 54 : index
    %526 = memref.load %arg3[%c54] : memref<57xf32, #tpu.memory_space<smem>>
    %527 = vector.broadcast %526 : f32 to vector<8x8xf32>
    %528 = arith.mulf %527, %6 : vector<8x8xf32>
    %529 = vector.broadcast %525 : f32 to vector<8x8xf32>
    %530 = arith.addf %529, %528 : vector<8x8xf32>
    %c55 = arith.constant 55 : index
    %531 = memref.load %arg3[%c55] : memref<57xf32, #tpu.memory_space<smem>>
    %532 = vector.broadcast %531 : f32 to vector<8x8xf32>
    %533 = arith.mulf %532, %13 : vector<8x8xf32>
    %534 = arith.addf %530, %533 : vector<8x8xf32>
    %c56 = arith.constant 56 : index
    %535 = memref.load %arg3[%c56] : memref<57xf32, #tpu.memory_space<smem>>
    %536 = vector.broadcast %535 : f32 to vector<8x8xf32>
    %537 = arith.mulf %536, %20 : vector<8x8xf32>
    %538 = arith.addf %534, %537 : vector<8x8xf32>
    %539 = math.tanh %538 : vector<8x8xf32>
    %cst_186 = arith.constant 1.275000e+02 : f32
    %540 = vector.broadcast %cst_186 : f32 to vector<8x8xf32>
    %541 = arith.mulf %540, %539 : vector<8x8xf32>
    %cst_187 = arith.constant 1.275000e+02 : f32
    %542 = vector.broadcast %cst_187 : f32 to vector<8x8xf32>
    %543 = arith.addf %541, %542 : vector<8x8xf32>
    %cst_188 = arith.constant 0.000000e+00 : f32
    %cst_189 = arith.constant 2.550000e+02 : f32
    %544 = vector.broadcast %cst_188 : f32 to vector<8x8xf32>
    %545 = arith.maximumf %544, %543 : vector<8x8xf32>
    %546 = vector.broadcast %cst_189 : f32 to vector<8x8xf32>
    %547 = arith.minimumf %546, %545 : vector<8x8xf32>
    %548 = arith.fptosi %547 : vector<8x8xf32> to vector<8x8xi32>
    %549 = arith.trunci %548 : vector<8x8xi32> to vector<8x8xi8>
    %c0_190 = arith.constant 0 : index
    %c18_191 = arith.constant 18 : index
    %c0_192 = arith.constant 0 : index
    %c0_193 = arith.constant 0 : index
    %550 = vector.load %arg5[%c0_190, %c18_191, %c0_192, %c0_193] : memref<1x19x8x8xi8, #tpu.memory_space<vmem>>, vector<1x1x8x8xi8>
    %551 = vector.shape_cast %550 : vector<1x1x8x8xi8> to vector<8x8xi8>
    %552 = vector.shape_cast %549 : vector<8x8xi8> to vector<1x1x8x8xi8>
    tpu.vector_store %arg5[%c0_190, %c18_191, %c0_192, %c0_193], %552 {strides = array<i32>} : memref<1x19x8x8xi8, #tpu.memory_space<vmem>>, vector<1x1x8x8xi8>,
    return
  }
  func.func @transform_0(%arg0: i32, %arg1: i32) -> (i32, i32, i32, i32) {
    %c0_i32 = arith.constant 0 : i32
    %c0_i32_0 = arith.constant 0 : i32
    %c0_i32_1 = arith.constant 0 : i32
    return %arg0, %c0_i32, %arg1, %c0_i32_0 : i32, i32, i32, i32
  }
  func.func @transform_1(%arg0: i32, %arg1: i32) -> i32 {
    %c0_i32 = arith.constant 0 : i32
    %c0_i32_0 = arith.constant 0 : i32
    return %c0_i32 : i32
  }
  func.func @transform_2(%arg0: i32, %arg1: i32) -> i32 {
    %c0_i32 = arith.constant 0 : i32
    %c0_i32_0 = arith.constant 0 : i32
    return %c0_i32 : i32
  }
  func.func @transform_3(%arg0: i32, %arg1: i32) -> (i32, i32, i32, i32) {
    %c0_i32 = arith.constant 0 : i32
    %c0_i32_0 = arith.constant 0 : i32
    %c0_i32_1 = arith.constant 0 : i32
    return %arg0, %c0_i32, %arg1, %c0_i32_0 : i32, i32, i32, i32
  }
}

</mosaic_0001>

<llo_original>
// kernel: tpu_custom_call.1
$region0: #{tpu_custom_call.1}
  #allocation0 [shape = 'u32[]', space=smem, size = 0x4, offset = 0x4, fixed_abs, tag = 'smem constant byte address 0x4 - core index']
  #allocation1 [shape = 'u32[72,128]{1,0:T(1,128)}', space=vmem, size = 0x9000, scoped, tag = 'internal scratch']
  %s0 = inlined_call_operand.hbm [shape: bf16[2,3,8,16], index: 0, kind: input, shape index: {}]
  %s1 = inlined_call_operand.hbm [shape: f32[57], index: 1, kind: input, shape index: {}]
  %s2 = inlined_call_operand.vmem [shape: f32[19], index: 2, kind: input, shape index: {}]
  %s3 = inlined_call_operand.vmem [shape: u8[2,19,8,8], index: 3, kind: output, shape index: {}]
  %s4 = sld [smem:[#allocation0]]
  $region57: #{tpu_custom_call.1} parent=0
    _
  %s6 = ssub.s32 1, %s4
  %s7 = scalar_select 0, %s6, %s4
  $region1: #{tpu_custom_call.1} parent=0
    #allocation2 [shape = 'u8[12288]{0}', space=vmem, size = 0x3000, scoped, tag = 'input window, operand 0']
    #allocation3 [shape = 's32[2]{0}', space=sflag, size = 0x8, scoped, tag = 'scoped memory for tpu_custom_call.1']
    #allocation4 [shape = 's32[2]{0}', space=sflag, size = 0x8, scoped, tag = 'scoped memory for tpu_custom_call.1']
    #allocation5 [shape = 's32[2]{0}', space=sflag, size = 0x8, scoped, tag = 'scoped memory for tpu_custom_call.1']
    #allocation6 [shape = 'u8[512]{0}', space=smem, size = 0x200, scoped, tag = 'input window, operand 1, single buffered']
    #allocation7 [shape = 'u8[512]{0}', space=smem, size = 0x200, scoped, tag = 'input window, operand 2, single buffered']
    %8 = vsyncpa [#allocation3], 0
    %s9 = scalar_lea.sflag [#allocation3], 1
    %10 = vsyncpa %s9, 0
    %11 = vsyncpa [#allocation4], 0
    %12 = vsyncpa [#allocation5], 0
    loop: start=0, step=1, limit=4
    $region2: #{tpu_custom_call.1} parent=1 // loop_pre_header
      _
    $region3: #{tpu_custom_call.1} parent=1 // loop_header
      %s14 = sphi 0, %s18
      %p15 = scmp.ge.s32.totalorder %s14, 4
      %s21 = sphi 0, %s33
      %s22 = sphi 0, %s29
      %s23 = sphi 0, %s21
      %s24 = sphi 0, %s22
      %s25 = sphi 0, %s23
      %s26 = sphi 0, %s24
      %s38 = sphi 0, %s40
      %s41 = sphi 0, %s38
      %s42 = sphi 0, %s41
      %s58 = sphi 0, %s42
      %s62 = sphi 0, %s62
      %s64 = sphi 0, %s62
      %s65 = sphi 0, %s64
      %s79 = sphi 0, %s65
      %s83 = sphi 0, %s83
      %s85 = sphi 0, %s83
      %s86 = sphi 0, %s85
      %s100 = sphi 0, %s86
      %s108 = sphi 0, %s110
      %s111 = sphi 0, %s108
      %s112 = sphi 0, %s111
      %s128 = sphi 0, %s112
    $region4: #{tpu_custom_call.1} parent=1 // loop_header_branch
      %17 = sbr.rel (%p15) target = $region8
    $region5: #{tpu_custom_call.1} parent=1 // loop_body
      %s19 = ssub.s32 %s14, 1
      %s20 = ssub.s32 %s14, 2
      %s27 = sadd.s32 1, %s22
      %p28 = scmp.ge.s32.totalorder %s27, 1
      %s29 = scalar_select %p28, 0, %s27
      %s30 = sadd.s32 1, %s21
      %s31 = scalar_select %p28, %s30, %s21
      %p32 = scmp.ge.s32.totalorder %s31, 2
      %s33 = scalar_select %p32, 0, %s31
      %s34 = ssub.s32 %s21, %s33
      %s35 = ssub.s32 %s22, %s29
      %s36 = sor.u32 %s34, %s35
      %p37 = scmp.eq.s32.totalorder %s36, 0
      %s39 = sadd.s32 %s38, 1
      %s40 = scalar_select %p37, %s38, %s39
      %p43 = pneg %p37
      %p44 = scmp.eq.s32.totalorder %s14, 1
      %p45 = por %p43, %p44
      %p46 = scmp.ne.s32.totalorder %s38, %s41
      %p47 = scmp.eq.s32.totalorder %s14, 0
      %p48 = por %p46, %p47
      %p49 = scmp.ne.s32.totalorder %s38, %s41
      %p50 = scmp.eq.s32.totalorder %s19, 1
      %p51 = por %p49, %p50
      %p52 = scmp.ne.s32.totalorder %s41, %s42
      %p53 = scmp.eq.s32.totalorder %s19, 0
      %p54 = por %p52, %p53
      %p55 = scmp.ne.s32.totalorder %s41, %s42
      %p56 = scmp.eq.s32.totalorder %s20, 1
      %p57 = por %p55, %p56
      %p59 = scmp.ne.s32.totalorder %s42, %s58
      %p60 = scmp.eq.s32.totalorder %s20, 0
      %p61 = por %p59, %p60
      %s63 = sadd.s32 %s62, 1
      %p66 = scmp.eq.s32.totalorder %s14, 1
      %p67 = scmp.ne.s32.totalorder %s62, %s64
      %p68 = scmp.eq.s32.totalorder %s14, 0
      %p69 = por %p67, %p68
      %p70 = scmp.ne.s32.totalorder %s62, %s64
      %p71 = scmp.eq.s32.totalorder %s19, 1
      %p72 = por %p70, %p71
      %p73 = scmp.ne.s32.totalorder %s64, %s65
      %p74 = scmp.eq.s32.totalorder %s19, 0
      %p75 = por %p73, %p74
      %p76 = scmp.ne.s32.totalorder %s64, %s65
      %p77 = scmp.eq.s32.totalorder %s20, 1
      %p78 = por %p76, %p77
      %p80 = scmp.ne.s32.totalorder %s65, %s79
      %p81 = scmp.eq.s32.totalorder %s20, 0
      %p82 = por %p80, %p81
      %s84 = sadd.s32 %s83, 1
      %p87 = scmp.eq.s32.totalorder %s14, 1
      %p88 = scmp.ne.s32.totalorder %s83, %s85
      %p89 = scmp.eq.s32.totalorder %s14, 0
      %p90 = por %p88, %p89
      %p91 = scmp.ne.s32.totalorder %s83, %s85
      %p92 = scmp.eq.s32.totalorder %s19, 1
      %p93 = por %p91, %p92
      %p94 = scmp.ne.s32.totalorder %s85, %s86
      %p95 = scmp.eq.s32.totalorder %s19, 0
      %p96 = por %p94, %p95
      %p97 = scmp.ne.s32.totalorder %s85, %s86
      %p98 = scmp.eq.s32.totalorder %s20, 1
      %p99 = por %p97, %p98
      %p101 = scmp.ne.s32.totalorder %s86, %s100
      %p102 = scmp.eq.s32.totalorder %s20, 0
      %p103 = por %p101, %p102
      %s104 = ssub.s32 %s21, %s33
      %s105 = ssub.s32 %s22, %s29
      %s106 = sor.u32 %s104, %s105
      %p107 = scmp.eq.s32.totalorder %s106, 0
      %s109 = sadd.s32 %s108, 1
      %s110 = scalar_select %p107, %s108, %s109
      %p113 = pneg %p107
      %p114 = scmp.eq.s32.totalorder %s14, 1
      %p115 = por %p113, %p114
      %p116 = scmp.ne.s32.totalorder %s108, %s111
      %p117 = scmp.eq.s32.totalorder %s14, 0
      %p118 = por %p116, %p117
      %p119 = scmp.ne.s32.totalorder %s108, %s111
      %p120 = scmp.eq.s32.totalorder %s19, 1
      %p121 = por %p119, %p120
      %p122 = scmp.ne.s32.totalorder %s111, %s112
      %p123 = scmp.eq.s32.totalorder %s19, 0
      %p124 = por %p122, %p123
      %p125 = scmp.ne.s32.totalorder %s111, %s112
      %p126 = scmp.eq.s32.totalorder %s20, 1
      %p127 = por %p125, %p126
      %p129 = scmp.ne.s32.totalorder %s112, %s128
      %p130 = scmp.eq.s32.totalorder %s20, 0
      %p131 = por %p129, %p130
      %p132 = scmp.le.s32.totalorder 1, %s14
      %p133 = scmp.lt.s32.totalorder %s14, 3
      %p134 = pnand %p132, %p133
      %p135 = pneg %p134
      // Predicated region
      $region9: #{tpu_custom_call.1} parent=5 // pred_check
        _
      $region10: #{tpu_custom_call.1} parent=5 // pred_check_branch
        %137 = sbr.rel (%p134) target = $region12
      $region11: #{tpu_custom_call.1} parent=5 // pred_region
        %s138 = ssub.s32 %s14, 1
        // Predicated region
        $region13: #{tpu_custom_call.1} parent=11 // pred_check
          %p139 = pneg %p75
        $region14: #{tpu_custom_call.1} parent=11 // pred_check_branch
          %141 = sbr.rel (%p139) target = $region16
        $region15: #{tpu_custom_call.1} parent=11 // pred_region
          %143 = vsyncadd [#allocation4], 0
          %s145 = sshll.u32 %s1, 4
          %s146 = int_to_ptr.hbm [resolvable:$true] %s145
          %148 = dma.hbm_to_smem %s146, 16, [#allocation6], [#allocation4]
        $region16: #{tpu_custom_call.1} parent=11 // pred_fallthru
          _
        // Predicated region
        $region17: #{tpu_custom_call.1} parent=11 // pred_check
          %p149 = pneg %p96
        $region18: #{tpu_custom_call.1} parent=11 // pred_check_branch
          %151 = sbr.rel (%p149) target = $region20
        $region19: #{tpu_custom_call.1} parent=11 // pred_region
          %153 = vsyncadd [#allocation5], 0
          %s155 = sshll.u32 %s2, 4
          %s156 = int_to_ptr.vmem [resolvable:$true] %s155
          %158 = dma.vmem_to_smem %s156, 16, [#allocation7], [#allocation5]
        $region20: #{tpu_custom_call.1} parent=11 // pred_fallthru
          _
      $region12: #{tpu_custom_call.1} parent=5 // pred_fallthru
        _
      %p159 = scmp.lt.s32.totalorder %s14, 2
      // Predicated region
      $region21: #{tpu_custom_call.1} parent=5 // pred_check
        %p160 = pneg %p159
      $region22: #{tpu_custom_call.1} parent=5 // pred_check_branch
        %162 = sbr.rel (%p160) target = $region24
      $region23: #{tpu_custom_call.1} parent=5 // pred_region
        // Predicated region
        $region25: #{tpu_custom_call.1} parent=23 // pred_check
          %p163 = pneg %p48
        $region26: #{tpu_custom_call.1} parent=23 // pred_check_branch
          %165 = sbr.rel (%p163) target = $region28
        $region27: #{tpu_custom_call.1} parent=23 // pred_region
          %s166 = sand.u32 %s38, 1
          %s167 = scalar_lea.sflag [#allocation3], %s166
          %s168 = sand.u32 %s38, 1
          %s169 = smul.addr %s168, 12
          %s170 = scalar_lea.vmem [#allocation2], %s169
          %172 = vsyncadd %s167, 0
          %s173 = smul.addr %s21, 3
          %s174 = sadd.s32 %s22, %s173
          %s175 = smul.addr %s174, 4
          %s176 = scalar_lea.hbm %s0, %s175
          %s177 = sshll.u32 %s176, 4
          %s178 = int_to_ptr.hbm [resolvable:$true] %s177
          %s179 = sshll.u32 %s170, 4
          %s180 = int_to_ptr.vmem [resolvable:$true] %s179
          %185 = dma.hbm_to_vmem [thread:$0]  %s178, 192, %s180, %s167, 64, 64, 4
        $region28: #{tpu_custom_call.1} parent=23 // pred_fallthru
          _
      $region24: #{tpu_custom_call.1} parent=5 // pred_fallthru
        _
      %p186 = scmp.le.s32.totalorder 1, %s14
      %p187 = scmp.lt.s32.totalorder %s14, 3
      %p188 = pnand %p186, %p187
      %p189 = pneg %p188
      // Predicated region
      $region29: #{tpu_custom_call.1} parent=5 // pred_check
        _
      $region30: #{tpu_custom_call.1} parent=5 // pred_check_branch
        %191 = sbr.rel (%p188) target = $region32
      $region31: #{tpu_custom_call.1} parent=5 // pred_region
        %s192 = ssub.s32 %s14, 1
        %s193 = sand.u32 %s41, 1
        %s194 = scalar_lea.sflag [#allocation3], %s193
        %s195 = sand.u32 %s41, 1
        %s196 = smul.addr %s195, 12
        %s197 = scalar_lea.vmem [#allocation2], %s196
        // Predicated region
        $region33: #{tpu_custom_call.1} parent=31 // pred_check
          %p198 = pneg %p54
        $region34: #{tpu_custom_call.1} parent=31 // pred_check_branch
          %200 = sbr.rel (%p198) target = $region36
        $region35: #{tpu_custom_call.1} parent=31 // pred_region
          %202 = dma.done %s194, 192
        $region36: #{tpu_custom_call.1} parent=31 // pred_fallthru
          _
        // Predicated region
        $region37: #{tpu_custom_call.1} parent=31 // pred_check
          %p203 = pneg %p75
        $region38: #{tpu_custom_call.1} parent=31 // pred_check_branch
          %205 = sbr.rel (%p203) target = $region40
        $region39: #{tpu_custom_call.1} parent=31 // pred_region
          %207 = dma.done [#allocation4], 16
        $region40: #{tpu_custom_call.1} parent=31 // pred_fallthru
          _
        // Predicated region
        $region41: #{tpu_custom_call.1} parent=31 // pred_check
          %p208 = pneg %p96
        $region42: #{tpu_custom_call.1} parent=31 // pred_check_branch
          %210 = sbr.rel (%p208) target = $region44
        $region43: #{tpu_custom_call.1} parent=31 // pred_region
          %212 = dma.done [#allocation5], 16
        $region44: #{tpu_custom_call.1} parent=31 // pred_fallthru
          _
        %213 = sfence
        %s214 = sand.u32 %s41, 1
        %s215 = scalar_lea.sflag [#allocation3], %s214
        %s216 = sand.u32 %s41, 1
        %s217 = smul.addr %s216, 12
        %s218 = scalar_lea.vmem [#allocation2], %s217
        %p219 = pneg %p54
        %p220 = pneg %p51
        %p221 = pneg %p75
        %p222 = pneg %p72
        %p223 = pneg %p96
        %p224 = pneg %p93
        %p225 = pneg %p124
        %p226 = pneg %p121
        %p227 = scmp.lt.s32.totalorder %s23, 1
        %s228 = scalar_select %p227, %s23, 1
        %p229 = scmp.lt.s32.totalorder %s24, 0
        %s230 = scalar_select %p229, %s24, 0
        %s231 = smul.addr %s228, 19
        %s232 = sadd.s32 %s230, %s231
        %s233 = smul.addr %s232, 2
        %s234 = scalar_lea.vmem %s3, %s233
        %p235 = scmp.lt.s32.totalorder %s23, 1
        %s236 = scalar_select %p235, %s23, 1
        %p237 = scmp.lt.s32.totalorder %s24, 0
        %s238 = scalar_select %p237, %s24, 0
        %s239 = smul.addr %s236, 19
        %s240 = sadd.s32 %s238, %s239
        %s241 = smul.addr %s240, 2
        %s242 = scalar_lea.vmem %s3, %s241
        %v243 = vld [vmem:[%s197] sm:$0xf]
        %v244 = vunpack.c.l.bf16 %v243
        %246 = vrot.lane.b32.xlu0 %v244, 120
        %v247 = vpop.permute.xlu0 %246
        %v249 = vadd.f32 %v244, %v247
        %s250 = scalar_lea.vmem %s197, 4 [#allocation2]
        %v251 = vld [vmem:[%s250] sm:$0xf]
        %v252 = vunpack.c.l.bf16 %v251
        %254 = vrot.lane.b32.xlu0 %v252, 120
        %v255 = vpop.permute.xlu0 %254
        %v257 = vadd.f32 %v252, %v255
        %s258 = scalar_lea.vmem %s197, 8 [#allocation2]
        %v259 = vld [vmem:[%s258] sm:$0xf]
        %v260 = vunpack.c.l.bf16 %v259
        %262 = vrot.lane.b32.xlu0 %v260, 120
        %v263 = vpop.permute.xlu0 %262
        %v265 = vadd.f32 %v260, %v263
        %s266 = sld [smem:[#allocation7]]
        %s267 = sld [smem:[#allocation6]]
        %v268 = vstv %s267
        %v269 = vmul.f32 %v268, %v249
        %v270 = vstv %s266
        %v271 = vadd.f32 %v270, %v269
        %s272 = sld [smem:[#allocation6 + $0x1]]
        %v273 = vstv %s272
        %v274 = vmul.f32 %v273, %v257
        %v275 = vadd.f32 %v271, %v274
        %s276 = sld [smem:[#allocation6 + $0x2]]
        %v277 = vstv %s276
        %v278 = vmul.f32 %v277, %v265
        %v279 = vadd.f32 %v275, %v278
        %v280 = vtanh.pop %v279
        %v281 = vmul.f32 %v280, 127.5
        %v282 = vadd.f32 %v281, 127.5
        %v283 = vmax.f32 %v282, 0.0
        %v284 = vmin.f32 %v283, 255.0
        %v285 = vcvt.f32.s32.to.zero.pseudo %v284
        %v286 = vpack.c.b16 %v285, %v285
        %v287 = vpack.c.b8 %v286, %v286
        %vm288 = vcmask 58368
        %289 = vst.msk [vmem:[%s242] sm:$0x3] %vm288, %v287
        %s290 = sld [smem:[#allocation7 + $0x1]]
        %s291 = sld [smem:[#allocation6 + $0x3]]
        %v292 = vstv %s291
        %v293 = vmul.f32 %v292, %v249
        %v294 = vstv %s290
        %v295 = vadd.f32 %v294, %v293
        %s296 = sld [smem:[#allocation6 + $0x4]]
        %v297 = vstv %s296
        %v298 = vmul.f32 %v297, %v257
        %v299 = vadd.f32 %v295, %v298
        %s300 = sld [smem:[#allocation6 + $0x5]]
        %v301 = vstv %s300
        %v302 = vmul.f32 %v301, %v265
        %v303 = vadd.f32 %v299, %v302
        %v304 = vtanh.pop %v303
        %v305 = vmul.f32 %v304, 127.5
        %v306 = vadd.f32 %v305, 127.5
        %v307 = vmax.f32 %v306, 0.0
        %v308 = vmin.f32 %v307, 255.0
        %v309 = vcvt.f32.s32.to.zero.pseudo %v308
        %v310 = vpack.c.b16 %v309, %v309
        %v311 = vpack.c.b8 %v310, %v310
        %s312 = scalar_lea.vmem %s242, 2
        %313 = vst.msk [vmem:[%s312] sm:$0x3] %vm288, %v311
        %s314 = sld [smem:[#allocation7 + $0x2]]
        %s315 = sld [smem:[#allocation6 + $0x6]]
        %v316 = vstv %s315
        %v317 = vmul.f32 %v316, %v249
        %v318 = vstv %s314
        %v319 = vadd.f32 %v318, %v317
        %s320 = sld [smem:[#allocation6 + $0x7]]
        %v321 = vstv %s320
        %v322 = vmul.f32 %v321, %v257
        %v323 = vadd.f32 %v319, %v322
        %s324 = sld [smem:[#allocation6 + $0x8]]
        %v325 = vstv %s324
        %v326 = vmul.f32 %v325, %v265
        %v327 = vadd.f32 %v323, %v326
        %v328 = vtanh.pop %v327
        %v329 = vmul.f32 %v328, 127.5
        %v330 = vadd.f32 %v329, 127.5
        %v331 = vmax.f32 %v330, 0.0
        %v332 = vmin.f32 %v331, 255.0
        %v333 = vcvt.f32.s32.to.zero.pseudo %v332
        %v334 = vpack.c.b16 %v333, %v333
        %v335 = vpack.c.b8 %v334, %v334
        %s336 = scalar_lea.vmem %s242, 4
        %337 = vst.msk [vmem:[%s336] sm:$0x3] %vm288, %v335
        %s338 = sld [smem:[#allocation7 + $0x3]]
        %s339 = sld [smem:[#allocation6 + $0x9]]
        %v340 = vstv %s339
        %v341 = vmul.f32 %v340, %v249
        %v342 = vstv %s338
        %v343 = vadd.f32 %v342, %v341
        %s344 = sld [smem:[#allocation6 + $0xa]]
        %v345 = vstv %s344
        %v346 = vmul.f32 %v345, %v257
        %v347 = vadd.f32 %v343, %v346
        %s348 = sld [smem:[#allocation6 + $0xb]]
        %v349 = vstv %s348
        %v350 = vmul.f32 %v349, %v265
        %v351 = vadd.f32 %v347, %v350
        %v352 = vtanh.pop %v351
        %v353 = vmul.f32 %v352, 127.5
        %v354 = vadd.f32 %v353, 127.5
        %v355 = vmax.f32 %v354, 0.0
        %v356 = vmin.f32 %v355, 255.0
        %v357 = vcvt.f32.s32.to.zero.pseudo %v356
        %v358 = vpack.c.b16 %v357, %v357
        %v359 = vpack.c.b8 %v358, %v358
        %s360 = scalar_lea.vmem %s242, 6
        %361 = vst.msk [vmem:[%s360] sm:$0x3] %vm288, %v359
        %s362 = sld [smem:[#allocation7 + $0x4]]
        %s363 = sld [smem:[#allocation6 + $0xc]]
        %v364 = vstv %s363
        %v365 = vmul.f32 %v364, %v249
        %v366 = vstv %s362
        %v367 = vadd.f32 %v366, %v365
        %s368 = sld [smem:[#allocation6 + $0xd]]
        %v369 = vstv %s368
        %v370 = vmul.f32 %v369, %v257
        %v371 = vadd.f32 %v367, %v370
        %s372 = sld [smem:[#allocation6 + $0xe]]
        %v373 = vstv %s372
        %v374 = vmul.f32 %v373, %v265
        %v375 = vadd.f32 %v371, %v374
        %v376 = vtanh.pop %v375
        %v377 = vmul.f32 %v376, 127.5
        %v378 = vadd.f32 %v377, 127.5
        %v379 = vmax.f32 %v378, 0.0
        %v380 = vmin.f32 %v379, 255.0
        %v381 = vcvt.f32.s32.to.zero.pseudo %v380
        %v382 = vpack.c.b16 %v381, %v381
        %v383 = vpack.c.b8 %v382, %v382
        %s384 = scalar_lea.vmem %s242, 8
        %385 = vst.msk [vmem:[%s384] sm:$0x3] %vm288, %v383
        %s386 = sld [smem:[#allocation7 + $0x5]]
        %s387 = sld [smem:[#allocation6 + $0xf]]
        %v388 = vstv %s387
        %v389 = vmul.f32 %v388, %v249
        %v390 = vstv %s386
        %v391 = vadd.f32 %v390, %v389
        %s392 = sld [smem:[#allocation6 + $0x10]]
        %v393 = vstv %s392
        %v394 = vmul.f32 %v393, %v257
        %v395 = vadd.f32 %v391, %v394
        %s396 = sld [smem:[#allocation6 + $0x11]]
        %v397 = vstv %s396
        %v398 = vmul.f32 %v397, %v265
        %v399 = vadd.f32 %v395, %v398
        %v400 = vtanh.pop %v399
        %v401 = vmul.f32 %v400, 127.5
        %v402 = vadd.f32 %v401, 127.5
        %v403 = vmax.f32 %v402, 0.0
        %v404 = vmin.f32 %v403, 255.0
        %v405 = vcvt.f32.s32.to.zero.pseudo %v404
        %v406 = vpack.c.b16 %v405, %v405
        %v407 = vpack.c.b8 %v406, %v406
        %s408 = scalar_lea.vmem %s242, 10
        %409 = vst.msk [vmem:[%s408] sm:$0x3] %vm288, %v407
        %s410 = sld [smem:[#allocation7 + $0x6]]
        %s411 = sld [smem:[#allocation6 + $0x12]]
        %v412 = vstv %s411
        %v413 = vmul.f32 %v412, %v249
        %v414 = vstv %s410
        %v415 = vadd.f32 %v414, %v413
        %s416 = sld [smem:[#allocation6 + $0x13]]
        %v417 = vstv %s416
        %v418 = vmul.f32 %v417, %v257
        %v419 = vadd.f32 %v415, %v418
        %s420 = sld [smem:[#allocation6 + $0x14]]
        %v421 = vstv %s420
        %v422 = vmul.f32 %v421, %v265
        %v423 = vadd.f32 %v419, %v422
        %v424 = vtanh.pop %v423
        %v425 = vmul.f32 %v424, 127.5
        %v426 = vadd.f32 %v425, 127.5
        %v427 = vmax.f32 %v426, 0.0
        %v428 = vmin.f32 %v427, 255.0
        %v429 = vcvt.f32.s32.to.zero.pseudo %v428
        %v430 = vpack.c.b16 %v429, %v429
        %v431 = vpack.c.b8 %v430, %v430
        %s432 = scalar_lea.vmem %s242, 12
        %433 = vst.msk [vmem:[%s432] sm:$0x3] %vm288, %v431
        %s434 = sld [smem:[#allocation7 + $0x7]]
        %s435 = sld [smem:[#allocation6 + $0x15]]
        %v436 = vstv %s435
        %v437 = vmul.f32 %v436, %v249
        %v438 = vstv %s434
        %v439 = vadd.f32 %v438, %v437
        %s440 = sld [smem:[#allocation6 + $0x16]]
        %v441 = vstv %s440
        %v442 = vmul.f32 %v441, %v257
        %v443 = vadd.f32 %v439, %v442
        %s444 = sld [smem:[#allocation6 + $0x17]]
        %v445 = vstv %s444
        %v446 = vmul.f32 %v445, %v265
        %v447 = vadd.f32 %v443, %v446
        %v448 = vtanh.pop %v447
        %v449 = vmul.f32 %v448, 127.5
        %v450 = vadd.f32 %v449, 127.5
        %v451 = vmax.f32 %v450, 0.0
        %v452 = vmin.f32 %v451, 255.0
        %v453 = vcvt.f32.s32.to.zero.pseudo %v452
        %v454 = vpack.c.b16 %v453, %v453
        %v455 = vpack.c.b8 %v454, %v454
        %s456 = scalar_lea.vmem %s242, 14
        %457 = vst.msk [vmem:[%s456] sm:$0x3] %vm288, %v455
        %s458 = sld [smem:[#allocation7 + $0x8]]
        %s459 = sld [smem:[#allocation6 + $0x18]]
        %v460 = vstv %s459
        %v461 = vmul.f32 %v460, %v249
        %v462 = vstv %s458
        %v463 = vadd.f32 %v462, %v461
        %s464 = sld [smem:[#allocation6 + $0x19]]
        %v465 = vstv %s464
        %v466 = vmul.f32 %v465, %v257
        %v467 = vadd.f32 %v463, %v466
        %s468 = sld [smem:[#allocation6 + $0x1a]]
        %v469 = vstv %s468
        %v470 = vmul.f32 %v469, %v265
        %v471 = vadd.f32 %v467, %v470
        %v472 = vtanh.pop %v471
        %v473 = vmul.f32 %v472, 127.5
        %v474 = vadd.f32 %v473, 127.5
        %v475 = vmax.f32 %v474, 0.0
        %v476 = vmin.f32 %v475, 255.0
        %v477 = vcvt.f32.s32.to.zero.pseudo %v476
        %v478 = vpack.c.b16 %v477, %v477
        %v479 = vpack.c.b8 %v478, %v478
        %s480 = scalar_lea.vmem %s242, 16
        %481 = vst.msk [vmem:[%s480] sm:$0x3] %vm288, %v479
        %s482 = sld [smem:[#allocation7 + $0x9]]
        %s483 = sld [smem:[#allocation6 + $0x1b]]
        %v484 = vstv %s483
        %v485 = vmul.f32 %v484, %v249
        %v486 = vstv %s482
        %v487 = vadd.f32 %v486, %v485
        %s488 = sld [smem:[#allocation6 + $0x1c]]
        %v489 = vstv %s488
        %v490 = vmul.f32 %v489, %v257
        %v491 = vadd.f32 %v487, %v490
        %s492 = sld [smem:[#allocation6 + $0x1d]]
        %v493 = vstv %s492
        %v494 = vmul.f32 %v493, %v265
        %v495 = vadd.f32 %v491, %v494
        %v496 = vtanh.pop %v495
        %v497 = vmul.f32 %v496, 127.5
        %v498 = vadd.f32 %v497, 127.5
        %v499 = vmax.f32 %v498, 0.0
        %v500 = vmin.f32 %v499, 255.0
        %v501 = vcvt.f32.s32.to.zero.pseudo %v500
        %v502 = vpack.c.b16 %v501, %v501
        %v503 = vpack.c.b8 %v502, %v502
        %s504 = scalar_lea.vmem %s242, 18
        %505 = vst.msk [vmem:[%s504] sm:$0x3] %vm288, %v503
        %s506 = sld [smem:[#allocation7 + $0xa]]
        %s507 = sld [smem:[#allocation6 + $0x1e]]
        %v508 = vstv %s507
        %v509 = vmul.f32 %v508, %v249
        %v510 = vstv %s506
        %v511 = vadd.f32 %v510, %v509
        %s512 = sld [smem:[#allocation6 + $0x1f]]
        %v513 = vstv %s512
        %v514 = vmul.f32 %v513, %v257
        %v515 = vadd.f32 %v511, %v514
        %s516 = sld [smem:[#allocation6 + $0x20]]
        %v517 = vstv %s516
        %v518 = vmul.f32 %v517, %v265
        %v519 = vadd.f32 %v515, %v518
        %v520 = vtanh.pop %v519
        %v521 = vmul.f32 %v520, 127.5
        %v522 = vadd.f32 %v521, 127.5
        %v523 = vmax.f32 %v522, 0.0
        %v524 = vmin.f32 %v523, 255.0
        %v525 = vcvt.f32.s32.to.zero.pseudo %v524
        %v526 = vpack.c.b16 %v525, %v525
        %v527 = vpack.c.b8 %v526, %v526
        %s528 = scalar_lea.vmem %s242, 20
        %529 = vst.msk [vmem:[%s528] sm:$0x3] %vm288, %v527
        %s530 = sld [smem:[#allocation7 + $0xb]]
        %s531 = sld [smem:[#allocation6 + $0x21]]
        %v532 = vstv %s531
        %v533 = vmul.f32 %v532, %v249
        %v534 = vstv %s530
        %v535 = vadd.f32 %v534, %v533
        %s536 = sld [smem:[#allocation6 + $0x22]]
        %v537 = vstv %s536
        %v538 = vmul.f32 %v537, %v257
        %v539 = vadd.f32 %v535, %v538
        %s540 = sld [smem:[#allocation6 + $0x23]]
        %v541 = vstv %s540
        %v542 = vmul.f32 %v541, %v265
        %v543 = vadd.f32 %v539, %v542
        %v544 = vtanh.pop %v543
        %v545 = vmul.f32 %v544, 127.5
        %v546 = vadd.f32 %v545, 127.5
        %v547 = vmax.f32 %v546, 0.0
        %v548 = vmin.f32 %v547, 255.0
        %v549 = vcvt.f32.s32.to.zero.pseudo %v548
        %v550 = vpack.c.b16 %v549, %v549
        %v551 = vpack.c.b8 %v550, %v550
        %s552 = scalar_lea.vmem %s242, 22
        %553 = vst.msk [vmem:[%s552] sm:$0x3] %vm288, %v551
        %s554 = sld [smem:[#allocation7 + $0xc]]
        %s555 = sld [smem:[#allocation6 + $0x24]]
        %v556 = vstv %s555
        %v557 = vmul.f32 %v556, %v249
        %v558 = vstv %s554
        %v559 = vadd.f32 %v558, %v557
        %s560 = sld [smem:[#allocation6 + $0x25]]
        %v561 = vstv %s560
        %v562 = vmul.f32 %v561, %v257
        %v563 = vadd.f32 %v559, %v562
        %s564 = sld [smem:[#allocation6 + $0x26]]
        %v565 = vstv %s564
        %v566 = vmul.f32 %v565, %v265
        %v567 = vadd.f32 %v563, %v566
        %v568 = vtanh.pop %v567
        %v569 = vmul.f32 %v568, 127.5
        %v570 = vadd.f32 %v569, 127.5
        %v571 = vmax.f32 %v570, 0.0
        %v572 = vmin.f32 %v571, 255.0
        %v573 = vcvt.f32.s32.to.zero.pseudo %v572
        %v574 = vpack.c.b16 %v573, %v573
        %v575 = vpack.c.b8 %v574, %v574
        %s576 = scalar_lea.vmem %s242, 24
        %577 = vst.msk [vmem:[%s576] sm:$0x3] %vm288, %v575
        %s578 = sld [smem:[#allocation7 + $0xd]]
        %s579 = sld [smem:[#allocation6 + $0x27]]
        %v580 = vstv %s579
        %v581 = vmul.f32 %v580, %v249
        %v582 = vstv %s578
        %v583 = vadd.f32 %v582, %v581
        %s584 = sld [smem:[#allocation6 + $0x28]]
        %v585 = vstv %s584
        %v586 = vmul.f32 %v585, %v257
        %v587 = vadd.f32 %v583, %v586
        %s588 = sld [smem:[#allocation6 + $0x29]]
        %v589 = vstv %s588
        %v590 = vmul.f32 %v589, %v265
        %v591 = vadd.f32 %v587, %v590
        %v592 = vtanh.pop %v591
        %v593 = vmul.f32 %v592, 127.5
        %v594 = vadd.f32 %v593, 127.5
        %v595 = vmax.f32 %v594, 0.0
        %v596 = vmin.f32 %v595, 255.0
        %v597 = vcvt.f32.s32.to.zero.pseudo %v596
        %v598 = vpack.c.b16 %v597, %v597
        %v599 = vpack.c.b8 %v598, %v598
        %s600 = scalar_lea.vmem %s242, 26
        %601 = vst.msk [vmem:[%s600] sm:$0x3] %vm288, %v599
        %s602 = sld [smem:[#allocation7 + $0xe]]
        %s603 = sld [smem:[#allocation6 + $0x2a]]
        %v604 = vstv %s603
        %v605 = vmul.f32 %v604, %v249
        %v606 = vstv %s602
        %v607 = vadd.f32 %v606, %v605
        %s608 = sld [smem:[#allocation6 + $0x2b]]
        %v609 = vstv %s608
        %v610 = vmul.f32 %v609, %v257
        %v611 = vadd.f32 %v607, %v610
        %s612 = sld [smem:[#allocation6 + $0x2c]]
        %v613 = vstv %s612
        %v614 = vmul.f32 %v613, %v265
        %v615 = vadd.f32 %v611, %v614
        %v616 = vtanh.pop %v615
        %v617 = vmul.f32 %v616, 127.5
        %v618 = vadd.f32 %v617, 127.5
        %v619 = vmax.f32 %v618, 0.0
        %v620 = vmin.f32 %v619, 255.0
        %v621 = vcvt.f32.s32.to.zero.pseudo %v620
        %v622 = vpack.c.b16 %v621, %v621
        %v623 = vpack.c.b8 %v622, %v622
        %s624 = scalar_lea.vmem %s242, 28
        %625 = vst.msk [vmem:[%s624] sm:$0x3] %vm288, %v623
        %s626 = sld [smem:[#allocation7 + $0xf]]
        %s627 = sld [smem:[#allocation6 + $0x2d]]
        %v628 = vstv %s627
        %v629 = vmul.f32 %v628, %v249
        %v630 = vstv %s626
        %v631 = vadd.f32 %v630, %v629
        %s632 = sld [smem:[#allocation6 + $0x2e]]
        %v633 = vstv %s632
        %v634 = vmul.f32 %v633, %v257
        %v635 = vadd.f32 %v631, %v634
        %s636 = sld [smem:[#allocation6 + $0x2f]]
        %v637 = vstv %s636
        %v638 = vmul.f32 %v637, %v265
        %v639 = vadd.f32 %v635, %v638
        %v640 = vtanh.pop %v639
        %v641 = vmul.f32 %v640, 127.5
        %v642 = vadd.f32 %v641, 127.5
        %v643 = vmax.f32 %v642, 0.0
        %v644 = vmin.f32 %v643, 255.0
        %v645 = vcvt.f32.s32.to.zero.pseudo %v644
        %v646 = vpack.c.b16 %v645, %v645
        %v647 = vpack.c.b8 %v646, %v646
        %s648 = scalar_lea.vmem %s242, 30
        %649 = vst.msk [vmem:[%s648] sm:$0x3] %vm288, %v647
        %s650 = sld [smem:[#allocation7 + $0x10]]
        %s651 = sld [smem:[#allocation6 + $0x30]]
        %v652 = vstv %s651
        %v653 = vmul.f32 %v652, %v249
        %v654 = vstv %s650
        %v655 = vadd.f32 %v654, %v653
        %s656 = sld [smem:[#allocation6 + $0x31]]
        %v657 = vstv %s656
        %v658 = vmul.f32 %v657, %v257
        %v659 = vadd.f32 %v655, %v658
        %s660 = sld [smem:[#allocation6 + $0x32]]
        %v661 = vstv %s660
        %v662 = vmul.f32 %v661, %v265
        %v663 = vadd.f32 %v659, %v662
        %v664 = vtanh.pop %v663
        %v665 = vmul.f32 %v664, 127.5
        %v666 = vadd.f32 %v665, 127.5
        %v667 = vmax.f32 %v666, 0.0
        %v668 = vmin.f32 %v667, 255.0
        %v669 = vcvt.f32.s32.to.zero.pseudo %v668
        %v670 = vpack.c.b16 %v669, %v669
        %v671 = vpack.c.b8 %v670, %v670
        %s672 = scalar_lea.vmem %s242, 32
        %673 = vst.msk [vmem:[%s672] sm:$0x3] %vm288, %v671
        %s674 = sld [smem:[#allocation7 + $0x11]]
        %s675 = sld [smem:[#allocation6 + $0x33]]
        %v676 = vstv %s675
        %v677 = vmul.f32 %v676, %v249
        %v678 = vstv %s674
        %v679 = vadd.f32 %v678, %v677
        %s680 = sld [smem:[#allocation6 + $0x34]]
        %v681 = vstv %s680
        %v682 = vmul.f32 %v681, %v257
        %v683 = vadd.f32 %v679, %v682
        %s684 = sld [smem:[#allocation6 + $0x35]]
        %v685 = vstv %s684
        %v686 = vmul.f32 %v685, %v265
        %v687 = vadd.f32 %v683, %v686
        %v688 = vtanh.pop %v687
        %v689 = vmul.f32 %v688, 127.5
        %v690 = vadd.f32 %v689, 127.5
        %v691 = vmax.f32 %v690, 0.0
        %v692 = vmin.f32 %v691, 255.0
        %v693 = vcvt.f32.s32.to.zero.pseudo %v692
        %v694 = vpack.c.b16 %v693, %v693
        %v695 = vpack.c.b8 %v694, %v694
        %s696 = scalar_lea.vmem %s242, 34
        %697 = vst.msk [vmem:[%s696] sm:$0x3] %vm288, %v695
        %s698 = sld [smem:[#allocation7 + $0x12]]
        %s699 = sld [smem:[#allocation6 + $0x36]]
        %v700 = vstv %s699
        %v701 = vmul.f32 %v700, %v249
        %v702 = vstv %s698
        %v703 = vadd.f32 %v702, %v701
        %s704 = sld [smem:[#allocation6 + $0x37]]
        %v705 = vstv %s704
        %v706 = vmul.f32 %v705, %v257
        %v707 = vadd.f32 %v703, %v706
        %s708 = sld [smem:[#allocation6 + $0x38]]
        %v709 = vstv %s708
        %v710 = vmul.f32 %v709, %v265
        %v711 = vadd.f32 %v707, %v710
        %v712 = vtanh.pop %v711
        %v713 = vmul.f32 %v712, 127.5
        %v714 = vadd.f32 %v713, 127.5
        %v715 = vmax.f32 %v714, 0.0
        %v716 = vmin.f32 %v715, 255.0
        %v717 = vcvt.f32.s32.to.zero.pseudo %v716
        %v718 = vpack.c.b16 %v717, %v717
        %v719 = vpack.c.b8 %v718, %v718
        %s720 = scalar_lea.vmem %s242, 36
        %721 = vst.msk [vmem:[%s720] sm:$0x3] %vm288, %v719
        %p722 = scmp.lt.s32.totalorder %s23, 1
        %s723 = scalar_select %p722, %s23, 1
        %p724 = scmp.lt.s32.totalorder %s24, 0
        %s725 = scalar_select %p724, %s24, 0
        %s726 = smul.addr %s723, 19
        %s727 = sadd.s32 %s725, %s726
        %s728 = smul.addr %s727, 2
        %s729 = scalar_lea.vmem %s3, %s728
        // Predicated region
        $region45: #{tpu_custom_call.1} parent=31 // pred_check
          %p730 = pneg %p121
        $region46: #{tpu_custom_call.1} parent=31 // pred_check_branch
          %732 = sbr.rel (%p730) target = $region48
        $region47: #{tpu_custom_call.1} parent=31 // pred_region
          _
        $region48: #{tpu_custom_call.1} parent=31 // pred_fallthru
          _
      $region32: #{tpu_custom_call.1} parent=5 // pred_fallthru
        _
      %p733 = scmp.le.s32.totalorder 2, %s14
      // Predicated region
      $region49: #{tpu_custom_call.1} parent=5 // pred_check
        %p734 = pneg %p733
      $region50: #{tpu_custom_call.1} parent=5 // pred_check_branch
        %736 = sbr.rel (%p734) target = $region52
      $region51: #{tpu_custom_call.1} parent=5 // pred_region
        %s737 = ssub.s32 %s14, 2
        // Predicated region
        $region53: #{tpu_custom_call.1} parent=51 // pred_check
          %p738 = pneg %p127
        $region54: #{tpu_custom_call.1} parent=51 // pred_check_branch
          %740 = sbr.rel (%p738) target = $region56
        $region55: #{tpu_custom_call.1} parent=51 // pred_region
          %p741 = scmp.lt.s32.totalorder %s25, 1
          %s742 = scalar_select %p741, %s25, 1
          %p743 = scmp.lt.s32.totalorder %s26, 0
          %s744 = scalar_select %p743, %s26, 0
          %s745 = smul.addr %s742, 19
          %s746 = sadd.s32 %s744, %s745
          %s747 = smul.addr %s746, 2
          %s748 = scalar_lea.vmem %s3, %s747
        $region56: #{tpu_custom_call.1} parent=51 // pred_fallthru
          _
      $region52: #{tpu_custom_call.1} parent=5 // pred_fallthru
        _
    $region6: #{tpu_custom_call.1} parent=1 // loop_footer
      %s18 = sadd.s32 1, %s14
    $region7: #{tpu_custom_call.1} parent=1 // loop_footer_branch
      %13 = sbr.rel target = $region3
    $region8: #{tpu_custom_call.1} parent=1 // loop_exit
      _
    %749 = vsyncpa [#allocation3], 1
    %s750 = scalar_lea.sflag [#allocation3], 1
    %751 = vsyncpa %s750, 1
    %752 = vsyncpa [#allocation4], 1
    %s753 = scalar_lea.sflag [#allocation4], 1
    %754 = vsyncpa %s753, 1
    %755 = vsyncpa [#allocation5], 1
    %s756 = scalar_lea.sflag [#allocation5], 1
    %757 = vsyncpa %s756, 1

</llo_original>
